<compile_context>
chip_gen: v7x
topology: tpu7x:2x2x1
jax: 0.10.0
libtpu: 0.0.40
codegen_flags: <defaults>
</compile_context>

<pallas_src>
import functools

import jax
import jax.numpy as jnp
from jax.experimental import pallas as pl
from jax.experimental.pallas import tpu as pltpu


def _dwconv_bn_lrelu_kernel(xp_ref, w_ref, b_ref, o_ref, *, H, W, Cp, neg_slope):
    """One image per grid step, channels-last (lane-dense) layout.

    xp_ref: (H+2, W+2, Cp)  halo-padded input plane for this image
    w_ref : (9, Cp)         BN-folded depthwise taps, row = dy*3 + dx (resident)
    b_ref : (1, Cp)         BN-folded per-channel bias (resident)
    o_ref : (H, W, Cp)
    """
    f32 = jnp.float32
    # Hoist the tap / bias sublane-broadcasts out of the row loop (JAX does not
    # CSE broadcast_in_dim).  At W=16, Cp=128 this is ~20 resident vregs.
    taps = [jnp.broadcast_to(w_ref[k].reshape(1, Cp).astype(f32), (W, Cp))
            for k in range(9)]
    bias = jnp.broadcast_to(b_ref[...].astype(f32), (W, Cp))

    # Row loop: only one row's accumulator (+ current input rows) is live at a
    # time, bounding vreg pressure.  dy shifts are leading-dim loads (free);
    # dx shifts are static sublane-axis slices (cheap with channels in lanes).
    for h in range(H):
        acc = bias
        for dy in range(3):
            xr = xp_ref[h + dy].astype(f32)                # (W+2, Cp)
            for dx in range(3):
                acc = acc + xr[dx:dx + W] * taps[dy * 3 + dx]
        # LeakyReLU; single unmasked lane-dense store per output row.
        o_ref[h] = jnp.where(acc >= 0.0, acc, neg_slope * acc).astype(o_ref.dtype)


def depthwise_conv(x, weight, gamma, beta, running_mean, running_var, *,
                   eps=1e-5, negative_slope=0.1):
    """Depthwise 3x3 conv (stride 1, pad 1, no bias) + BatchNorm(eval) + LeakyReLU."""
    N, C, H, W = x.shape
    assert weight.shape == (C, 1, 3, 3), "expect depthwise weight (C, 1, 3, 3)"
    f32 = jnp.float32

    # Fold inference BatchNorm into the conv: y = conv(x, w*s) + (beta - mean*s)
    inv_std = jax.lax.rsqrt(running_var.astype(f32) + jnp.float32(eps))
    scale = gamma.astype(f32) * inv_std                              # (C,)
    bias = beta.astype(f32) - running_mean.astype(f32) * scale       # (C,)
    w_eff = weight.reshape(C, 3, 3).astype(f32) * scale[:, None, None]

    LANE = 128
    Cp = max(LANE, ((C + LANE - 1) // LANE) * LANE)

    # Channels-last, lane-padded (C -> Cp) and 1-px halo-padded input.  The
    # transpose is mandatory layout plumbing; the pads fuse into that same
    # copy, so the halo costs no extra HBM round trip.
    xt = jnp.transpose(x, (0, 2, 3, 1))                              # (N, H, W, C)
    xt = jnp.pad(xt, ((0, 0), (1, 1), (1, 1), (0, Cp - C)))          # (N, H+2, W+2, Cp)
    xt = xt.reshape(N * (H + 2), W + 2, Cp)

    # Taps as lane vectors, row-major over (dy, dx); padded channels get zero
    # taps / zero bias and are sliced off after the kernel.
    w_taps = jnp.pad(jnp.transpose(w_eff, (1, 2, 0)).reshape(9, C),
                     ((0, 0), (0, Cp - C)))                          # (9, Cp)
    b_vec = jnp.pad(bias, (0, Cp - C)).reshape(1, Cp)                # (1, Cp)

    out = pl.pallas_call(
        functools.partial(_dwconv_bn_lrelu_kernel, H=H, W=W, Cp=Cp,
                          neg_slope=float(negative_slope)),
        out_shape=jax.ShapeDtypeStruct((N * H, W, Cp), f32),
        grid_spec=pltpu.PrefetchScalarGridSpec(
            num_scalar_prefetch=0,
            grid=(N,),
            in_specs=[
                pl.BlockSpec((H + 2, W + 2, Cp), lambda n: (n, 0, 0)),
                pl.BlockSpec((9, Cp), lambda n: (0, 0)),   # constant -> resident
                pl.BlockSpec((1, Cp), lambda n: (0, 0)),   # constant -> resident
            ],
            out_specs=pl.BlockSpec((H, W, Cp), lambda n: (n, 0, 0)),
        ),
        compiler_params=pltpu.CompilerParams(
            dimension_semantics=("parallel",),
        ),
    )(xt, w_taps, b_vec)

    # Interior channels + back to NCHW (slice fuses into the transpose copy).
    out = out.reshape(N, H, W, Cp)[:, :, :, :C]
    return jnp.transpose(out, (0, 3, 1, 2))


def _reference(x, weight, gamma, beta, running_mean, running_var,
               eps=1e-5, negative_slope=0.1):
    """Pure-JAX reference: grouped conv + inference BN + LeakyReLU."""
    C = x.shape[1]
    y = jax.lax.conv_general_dilated(
        x.astype(jnp.float32), weight.astype(jnp.float32),
        window_strides=(1, 1), padding=((1, 1), (1, 1)),
        dimension_numbers=("NCHW", "OIHW", "NCHW"),
        feature_group_count=C)
    inv_std = jax.lax.rsqrt(running_var.astype(jnp.float32) + jnp.float32(eps))
    scale = (gamma.astype(jnp.float32) * inv_std)[None, :, None, None]
    y = (y - running_mean.astype(jnp.float32)[None, :, None, None]) * scale
    y = y + beta.astype(jnp.float32)[None, :, None, None]
    return jnp.where(y >= 0.0, y, negative_slope * y)


if __name__ == "__main__":
    key = jax.random.PRNGKey(0)
    kx, kw, kg, kb, km, kv = jax.random.split(key, 6)

    N, C, H, W = 2, 4, 16, 16
    x = jax.random.normal(kx, (N, C, H, W), dtype=jnp.float32)
    weight = 0.2 * jax.random.normal(kw, (C, 1, 3, 3), dtype=jnp.float32)
    gamma = 1.0 + 0.1 * jax.random.normal(kg, (C,), dtype=jnp.float32)
    beta = 0.1 * jax.random.normal(kb, (C,), dtype=jnp.float32)
    running_mean = 0.1 * jax.random.normal(km, (C,), dtype=jnp.float32)
    running_var = 0.5 + jax.random.uniform(kv, (C,), dtype=jnp.float32)

    out = depthwise_conv(x, weight, gamma, beta, running_mean, running_var)
    out = jax.block_until_ready(out)

    ref = _reference(x, weight, gamma, beta, running_mean, running_var)
    assert out.shape == (N, C, H, W)
    max_err = float(jnp.max(jnp.abs(out - ref)))
    assert jnp.allclose(out, ref, rtol=1e-5, atol=1e-5), ("mismatch", max_err)

    print("KERNEL_OK")
</pallas_src>

<mosaic_0001>
module attributes {stable_mosaic.version = 11 : i64} {
  func.func @_dwconv_bn_lrelu_kernel(%arg0: i32, %arg1: memref<18x18x128xf32, #tpu.memory_space<vmem>>, %arg2: memref<9x128xf32, #tpu.memory_space<vmem>>, %arg3: memref<1x128xf32, #tpu.memory_space<vmem>>, %arg4: memref<16x16x128xf32, #tpu.memory_space<vmem>>) attributes {dimension_semantics = [#tpu.dimension_semantics<parallel>], iteration_bounds = array<i64: 2>, scalar_prefetch = 0 : i64, scratch_operands = 0 : i64, tpu.core_type = #tpu.core_type<tc>, window_params = [{transform_indices = @transform_0, window_bounds = array<i64: 18, 18, 128>}, {pipeline_mode = #tpu.pipeline_mode<synchronous>, transform_indices = @transform_1, window_bounds = array<i64: 9, 128>}, {pipeline_mode = #tpu.pipeline_mode<synchronous>, transform_indices = @transform_2, window_bounds = array<i64: 1, 128>}, {transform_indices = @transform_3, window_bounds = array<i64: 16, 16, 128>}]} {
    %c0 = arith.constant 0 : index
    %c0_0 = arith.constant 0 : index
    %0 = vector.load %arg2[%c0, %c0_0] : memref<9x128xf32, #tpu.memory_space<vmem>>, vector<1x128xf32>
    %1 = vector.shape_cast %0 : vector<1x128xf32> to vector<128xf32>
    %2 = vector.shape_cast %1 : vector<128xf32> to vector<1x128xf32>
    %3 = vector.shape_cast %2 : vector<1x128xf32> to vector<1x128xf32>
    %4 = vector.broadcast %3 : vector<1x128xf32> to vector<16x128xf32>
    %c1 = arith.constant 1 : index
    %c0_1 = arith.constant 0 : index
    %5 = vector.load %arg2[%c1, %c0_1] : memref<9x128xf32, #tpu.memory_space<vmem>>, vector<1x128xf32>
    %6 = vector.shape_cast %5 : vector<1x128xf32> to vector<128xf32>
    %7 = vector.shape_cast %6 : vector<128xf32> to vector<1x128xf32>
    %8 = vector.shape_cast %7 : vector<1x128xf32> to vector<1x128xf32>
    %9 = vector.broadcast %8 : vector<1x128xf32> to vector<16x128xf32>
    %c2 = arith.constant 2 : index
    %c0_2 = arith.constant 0 : index
    %10 = vector.load %arg2[%c2, %c0_2] : memref<9x128xf32, #tpu.memory_space<vmem>>, vector<1x128xf32>
    %11 = vector.shape_cast %10 : vector<1x128xf32> to vector<128xf32>
    %12 = vector.shape_cast %11 : vector<128xf32> to vector<1x128xf32>
    %13 = vector.shape_cast %12 : vector<1x128xf32> to vector<1x128xf32>
    %14 = vector.broadcast %13 : vector<1x128xf32> to vector<16x128xf32>
    %c3 = arith.constant 3 : index
    %c0_3 = arith.constant 0 : index
    %15 = vector.load %arg2[%c3, %c0_3] : memref<9x128xf32, #tpu.memory_space<vmem>>, vector<1x128xf32>
    %16 = vector.shape_cast %15 : vector<1x128xf32> to vector<128xf32>
    %17 = vector.shape_cast %16 : vector<128xf32> to vector<1x128xf32>
    %18 = vector.shape_cast %17 : vector<1x128xf32> to vector<1x128xf32>
    %19 = vector.broadcast %18 : vector<1x128xf32> to vector<16x128xf32>
    %c4 = arith.constant 4 : index
    %c0_4 = arith.constant 0 : index
    %20 = vector.load %arg2[%c4, %c0_4] : memref<9x128xf32, #tpu.memory_space<vmem>>, vector<1x128xf32>
    %21 = vector.shape_cast %20 : vector<1x128xf32> to vector<128xf32>
    %22 = vector.shape_cast %21 : vector<128xf32> to vector<1x128xf32>
    %23 = vector.shape_cast %22 : vector<1x128xf32> to vector<1x128xf32>
    %24 = vector.broadcast %23 : vector<1x128xf32> to vector<16x128xf32>
    %c5 = arith.constant 5 : index
    %c0_5 = arith.constant 0 : index
    %25 = vector.load %arg2[%c5, %c0_5] : memref<9x128xf32, #tpu.memory_space<vmem>>, vector<1x128xf32>
    %26 = vector.shape_cast %25 : vector<1x128xf32> to vector<128xf32>
    %27 = vector.shape_cast %26 : vector<128xf32> to vector<1x128xf32>
    %28 = vector.shape_cast %27 : vector<1x128xf32> to vector<1x128xf32>
    %29 = vector.broadcast %28 : vector<1x128xf32> to vector<16x128xf32>
    %c6 = arith.constant 6 : index
    %c0_6 = arith.constant 0 : index
    %30 = vector.load %arg2[%c6, %c0_6] : memref<9x128xf32, #tpu.memory_space<vmem>>, vector<1x128xf32>
    %31 = vector.shape_cast %30 : vector<1x128xf32> to vector<128xf32>
    %32 = vector.shape_cast %31 : vector<128xf32> to vector<1x128xf32>
    %33 = vector.shape_cast %32 : vector<1x128xf32> to vector<1x128xf32>
    %34 = vector.broadcast %33 : vector<1x128xf32> to vector<16x128xf32>
    %c7 = arith.constant 7 : index
    %c0_7 = arith.constant 0 : index
    %35 = vector.load %arg2[%c7, %c0_7] : memref<9x128xf32, #tpu.memory_space<vmem>>, vector<1x128xf32>
    %36 = vector.shape_cast %35 : vector<1x128xf32> to vector<128xf32>
    %37 = vector.shape_cast %36 : vector<128xf32> to vector<1x128xf32>
    %38 = vector.shape_cast %37 : vector<1x128xf32> to vector<1x128xf32>
    %39 = vector.broadcast %38 : vector<1x128xf32> to vector<16x128xf32>
    %c8 = arith.constant 8 : index
    %c0_8 = arith.constant 0 : index
    %40 = vector.load %arg2[%c8, %c0_8] : memref<9x128xf32, #tpu.memory_space<vmem>>, vector<1x128xf32>
    %41 = vector.shape_cast %40 : vector<1x128xf32> to vector<128xf32>
    %42 = vector.shape_cast %41 : vector<128xf32> to vector<1x128xf32>
    %43 = vector.shape_cast %42 : vector<1x128xf32> to vector<1x128xf32>
    %44 = vector.broadcast %43 : vector<1x128xf32> to vector<16x128xf32>
    %c0_9 = arith.constant 0 : index
    %c0_10 = arith.constant 0 : index
    %45 = vector.load %arg3[%c0_9, %c0_10] : memref<1x128xf32, #tpu.memory_space<vmem>>, vector<1x128xf32>
    %46 = vector.shape_cast %45 : vector<1x128xf32> to vector<1x128xf32>
    %47 = vector.broadcast %46 : vector<1x128xf32> to vector<16x128xf32>
    %c0_11 = arith.constant 0 : index
    %c0_12 = arith.constant 0 : index
    %c0_13 = arith.constant 0 : index
    %48 = vector.load %arg1[%c0_11, %c0_12, %c0_13] : memref<18x18x128xf32, #tpu.memory_space<vmem>>, vector<1x18x128xf32>
    %49 = vector.shape_cast %48 : vector<1x18x128xf32> to vector<18x128xf32>
    %50 = vector.extract_strided_slice %49 {offsets = [0, 0], sizes = [16, 128], strides = [1, 1]} : vector<18x128xf32> to vector<16x128xf32>
    %51 = arith.mulf %50, %4 : vector<16x128xf32>
    %52 = arith.addf %47, %51 : vector<16x128xf32>
    %53 = vector.extract_strided_slice %49 {offsets = [1, 0], sizes = [16, 128], strides = [1, 1]} : vector<18x128xf32> to vector<16x128xf32>
    %54 = arith.mulf %53, %9 : vector<16x128xf32>
    %55 = arith.addf %52, %54 : vector<16x128xf32>
    %56 = vector.extract_strided_slice %49 {offsets = [2, 0], sizes = [16, 128], strides = [1, 1]} : vector<18x128xf32> to vector<16x128xf32>
    %57 = arith.mulf %56, %14 : vector<16x128xf32>
    %58 = arith.addf %55, %57 : vector<16x128xf32>
    %c1_14 = arith.constant 1 : index
    %c0_15 = arith.constant 0 : index
    %c0_16 = arith.constant 0 : index
    %59 = vector.load %arg1[%c1_14, %c0_15, %c0_16] : memref<18x18x128xf32, #tpu.memory_space<vmem>>, vector<1x18x128xf32>
    %60 = vector.shape_cast %59 : vector<1x18x128xf32> to vector<18x128xf32>
    %61 = vector.extract_strided_slice %60 {offsets = [0, 0], sizes = [16, 128], strides = [1, 1]} : vector<18x128xf32> to vector<16x128xf32>
    %62 = arith.mulf %61, %19 : vector<16x128xf32>
    %63 = arith.addf %58, %62 : vector<16x128xf32>
    %64 = vector.extract_strided_slice %60 {offsets = [1, 0], sizes = [16, 128], strides = [1, 1]} : vector<18x128xf32> to vector<16x128xf32>
    %65 = arith.mulf %64, %24 : vector<16x128xf32>
    %66 = arith.addf %63, %65 : vector<16x128xf32>
    %67 = vector.extract_strided_slice %60 {offsets = [2, 0], sizes = [16, 128], strides = [1, 1]} : vector<18x128xf32> to vector<16x128xf32>
    %68 = arith.mulf %67, %29 : vector<16x128xf32>
    %69 = arith.addf %66, %68 : vector<16x128xf32>
    %c2_17 = arith.constant 2 : index
    %c0_18 = arith.constant 0 : index
    %c0_19 = arith.constant 0 : index
    %70 = vector.load %arg1[%c2_17, %c0_18, %c0_19] : memref<18x18x128xf32, #tpu.memory_space<vmem>>, vector<1x18x128xf32>
    %71 = vector.shape_cast %70 : vector<1x18x128xf32> to vector<18x128xf32>
    %72 = vector.extract_strided_slice %71 {offsets = [0, 0], sizes = [16, 128], strides = [1, 1]} : vector<18x128xf32> to vector<16x128xf32>
    %73 = arith.mulf %72, %34 : vector<16x128xf32>
    %74 = arith.addf %69, %73 : vector<16x128xf32>
    %75 = vector.extract_strided_slice %71 {offsets = [1, 0], sizes = [16, 128], strides = [1, 1]} : vector<18x128xf32> to vector<16x128xf32>
    %76 = arith.mulf %75, %39 : vector<16x128xf32>
    %77 = arith.addf %74, %76 : vector<16x128xf32>
    %78 = vector.extract_strided_slice %71 {offsets = [2, 0], sizes = [16, 128], strides = [1, 1]} : vector<18x128xf32> to vector<16x128xf32>
    %79 = arith.mulf %78, %44 : vector<16x128xf32>
    %80 = arith.addf %77, %79 : vector<16x128xf32>
    %cst = arith.constant 0.000000e+00 : f32
    %81 = vector.broadcast %cst : f32 to vector<16x128xf32>
    %82 = arith.cmpf oge, %80, %81 : vector<16x128xf32>
    %cst_20 = arith.constant 1.000000e-01 : f32
    %83 = vector.broadcast %cst_20 : f32 to vector<16x128xf32>
    %84 = arith.mulf %83, %80 : vector<16x128xf32>
    %85 = arith.select %82, %80, %84 : vector<16x128xi1>, vector<16x128xf32>
    %c0_21 = arith.constant 0 : index
    %c0_22 = arith.constant 0 : index
    %c0_23 = arith.constant 0 : index
    %86 = vector.load %arg4[%c0_21, %c0_22, %c0_23] : memref<16x16x128xf32, #tpu.memory_space<vmem>>, vector<1x16x128xf32>
    %87 = vector.shape_cast %86 : vector<1x16x128xf32> to vector<16x128xf32>
    %88 = vector.shape_cast %85 : vector<16x128xf32> to vector<1x16x128xf32>
    tpu.vector_store %arg4[%c0_21, %c0_22, %c0_23], %88 {strides = array<i32>} : memref<16x16x128xf32, #tpu.memory_space<vmem>>, vector<1x16x128xf32>,
    %c1_24 = arith.constant 1 : index
    %c0_25 = arith.constant 0 : index
    %c0_26 = arith.constant 0 : index
    %89 = vector.load %arg1[%c1_24, %c0_25, %c0_26] : memref<18x18x128xf32, #tpu.memory_space<vmem>>, vector<1x18x128xf32>
    %90 = vector.shape_cast %89 : vector<1x18x128xf32> to vector<18x128xf32>
    %91 = vector.extract_strided_slice %90 {offsets = [0, 0], sizes = [16, 128], strides = [1, 1]} : vector<18x128xf32> to vector<16x128xf32>
    %92 = arith.mulf %91, %4 : vector<16x128xf32>
    %93 = arith.addf %47, %92 : vector<16x128xf32>
    %94 = vector.extract_strided_slice %90 {offsets = [1, 0], sizes = [16, 128], strides = [1, 1]} : vector<18x128xf32> to vector<16x128xf32>
    %95 = arith.mulf %94, %9 : vector<16x128xf32>
    %96 = arith.addf %93, %95 : vector<16x128xf32>
    %97 = vector.extract_strided_slice %90 {offsets = [2, 0], sizes = [16, 128], strides = [1, 1]} : vector<18x128xf32> to vector<16x128xf32>
    %98 = arith.mulf %97, %14 : vector<16x128xf32>
    %99 = arith.addf %96, %98 : vector<16x128xf32>
    %c2_27 = arith.constant 2 : index
    %c0_28 = arith.constant 0 : index
    %c0_29 = arith.constant 0 : index
    %100 = vector.load %arg1[%c2_27, %c0_28, %c0_29] : memref<18x18x128xf32, #tpu.memory_space<vmem>>, vector<1x18x128xf32>
    %101 = vector.shape_cast %100 : vector<1x18x128xf32> to vector<18x128xf32>
    %102 = vector.extract_strided_slice %101 {offsets = [0, 0], sizes = [16, 128], strides = [1, 1]} : vector<18x128xf32> to vector<16x128xf32>
    %103 = arith.mulf %102, %19 : vector<16x128xf32>
    %104 = arith.addf %99, %103 : vector<16x128xf32>
    %105 = vector.extract_strided_slice %101 {offsets = [1, 0], sizes = [16, 128], strides = [1, 1]} : vector<18x128xf32> to vector<16x128xf32>
    %106 = arith.mulf %105, %24 : vector<16x128xf32>
    %107 = arith.addf %104, %106 : vector<16x128xf32>
    %108 = vector.extract_strided_slice %101 {offsets = [2, 0], sizes = [16, 128], strides = [1, 1]} : vector<18x128xf32> to vector<16x128xf32>
    %109 = arith.mulf %108, %29 : vector<16x128xf32>
    %110 = arith.addf %107, %109 : vector<16x128xf32>
    %c3_30 = arith.constant 3 : index
    %c0_31 = arith.constant 0 : index
    %c0_32 = arith.constant 0 : index
    %111 = vector.load %arg1[%c3_30, %c0_31, %c0_32] : memref<18x18x128xf32, #tpu.memory_space<vmem>>, vector<1x18x128xf32>
    %112 = vector.shape_cast %111 : vector<1x18x128xf32> to vector<18x128xf32>
    %113 = vector.extract_strided_slice %112 {offsets = [0, 0], sizes = [16, 128], strides = [1, 1]} : vector<18x128xf32> to vector<16x128xf32>
    %114 = arith.mulf %113, %34 : vector<16x128xf32>
    %115 = arith.addf %110, %114 : vector<16x128xf32>
    %116 = vector.extract_strided_slice %112 {offsets = [1, 0], sizes = [16, 128], strides = [1, 1]} : vector<18x128xf32> to vector<16x128xf32>
    %117 = arith.mulf %116, %39 : vector<16x128xf32>
    %118 = arith.addf %115, %117 : vector<16x128xf32>
    %119 = vector.extract_strided_slice %112 {offsets = [2, 0], sizes = [16, 128], strides = [1, 1]} : vector<18x128xf32> to vector<16x128xf32>
    %120 = arith.mulf %119, %44 : vector<16x128xf32>
    %121 = arith.addf %118, %120 : vector<16x128xf32>
    %cst_33 = arith.constant 0.000000e+00 : f32
    %122 = vector.broadcast %cst_33 : f32 to vector<16x128xf32>
    %123 = arith.cmpf oge, %121, %122 : vector<16x128xf32>
    %cst_34 = arith.constant 1.000000e-01 : f32
    %124 = vector.broadcast %cst_34 : f32 to vector<16x128xf32>
    %125 = arith.mulf %124, %121 : vector<16x128xf32>
    %126 = arith.select %123, %121, %125 : vector<16x128xi1>, vector<16x128xf32>
    %c1_35 = arith.constant 1 : index
    %c0_36 = arith.constant 0 : index
    %c0_37 = arith.constant 0 : index
    %127 = vector.load %arg4[%c1_35, %c0_36, %c0_37] : memref<16x16x128xf32, #tpu.memory_space<vmem>>, vector<1x16x128xf32>
    %128 = vector.shape_cast %127 : vector<1x16x128xf32> to vector<16x128xf32>
    %129 = vector.shape_cast %126 : vector<16x128xf32> to vector<1x16x128xf32>
    tpu.vector_store %arg4[%c1_35, %c0_36, %c0_37], %129 {strides = array<i32>} : memref<16x16x128xf32, #tpu.memory_space<vmem>>, vector<1x16x128xf32>,
    %c2_38 = arith.constant 2 : index
    %c0_39 = arith.constant 0 : index
    %c0_40 = arith.constant 0 : index
    %130 = vector.load %arg1[%c2_38, %c0_39, %c0_40] : memref<18x18x128xf32, #tpu.memory_space<vmem>>, vector<1x18x128xf32>
    %131 = vector.shape_cast %130 : vector<1x18x128xf32> to vector<18x128xf32>
    %132 = vector.extract_strided_slice %131 {offsets = [0, 0], sizes = [16, 128], strides = [1, 1]} : vector<18x128xf32> to vector<16x128xf32>
    %133 = arith.mulf %132, %4 : vector<16x128xf32>
    %134 = arith.addf %47, %133 : vector<16x128xf32>
    %135 = vector.extract_strided_slice %131 {offsets = [1, 0], sizes = [16, 128], strides = [1, 1]} : vector<18x128xf32> to vector<16x128xf32>
    %136 = arith.mulf %135, %9 : vector<16x128xf32>
    %137 = arith.addf %134, %136 : vector<16x128xf32>
    %138 = vector.extract_strided_slice %131 {offsets = [2, 0], sizes = [16, 128], strides = [1, 1]} : vector<18x128xf32> to vector<16x128xf32>
    %139 = arith.mulf %138, %14 : vector<16x128xf32>
    %140 = arith.addf %137, %139 : vector<16x128xf32>
    %c3_41 = arith.constant 3 : index
    %c0_42 = arith.constant 0 : index
    %c0_43 = arith.constant 0 : index
    %141 = vector.load %arg1[%c3_41, %c0_42, %c0_43] : memref<18x18x128xf32, #tpu.memory_space<vmem>>, vector<1x18x128xf32>
    %142 = vector.shape_cast %141 : vector<1x18x128xf32> to vector<18x128xf32>
    %143 = vector.extract_strided_slice %142 {offsets = [0, 0], sizes = [16, 128], strides = [1, 1]} : vector<18x128xf32> to vector<16x128xf32>
    %144 = arith.mulf %143, %19 : vector<16x128xf32>
    %145 = arith.addf %140, %144 : vector<16x128xf32>
    %146 = vector.extract_strided_slice %142 {offsets = [1, 0], sizes = [16, 128], strides = [1, 1]} : vector<18x128xf32> to vector<16x128xf32>
    %147 = arith.mulf %146, %24 : vector<16x128xf32>
    %148 = arith.addf %145, %147 : vector<16x128xf32>
    %149 = vector.extract_strided_slice %142 {offsets = [2, 0], sizes = [16, 128], strides = [1, 1]} : vector<18x128xf32> to vector<16x128xf32>
    %150 = arith.mulf %149, %29 : vector<16x128xf32>
    %151 = arith.addf %148, %150 : vector<16x128xf32>
    %c4_44 = arith.constant 4 : index
    %c0_45 = arith.constant 0 : index
    %c0_46 = arith.constant 0 : index
    %152 = vector.load %arg1[%c4_44, %c0_45, %c0_46] : memref<18x18x128xf32, #tpu.memory_space<vmem>>, vector<1x18x128xf32>
    %153 = vector.shape_cast %152 : vector<1x18x128xf32> to vector<18x128xf32>
    %154 = vector.extract_strided_slice %153 {offsets = [0, 0], sizes = [16, 128], strides = [1, 1]} : vector<18x128xf32> to vector<16x128xf32>
    %155 = arith.mulf %154, %34 : vector<16x128xf32>
    %156 = arith.addf %151, %155 : vector<16x128xf32>
    %157 = vector.extract_strided_slice %153 {offsets = [1, 0], sizes = [16, 128], strides = [1, 1]} : vector<18x128xf32> to vector<16x128xf32>
    %158 = arith.mulf %157, %39 : vector<16x128xf32>
    %159 = arith.addf %156, %158 : vector<16x128xf32>
    %160 = vector.extract_strided_slice %153 {offsets = [2, 0], sizes = [16, 128], strides = [1, 1]} : vector<18x128xf32> to vector<16x128xf32>
    %161 = arith.mulf %160, %44 : vector<16x128xf32>
    %162 = arith.addf %159, %161 : vector<16x128xf32>
    %cst_47 = arith.constant 0.000000e+00 : f32
    %163 = vector.broadcast %cst_47 : f32 to vector<16x128xf32>
    %164 = arith.cmpf oge, %162, %163 : vector<16x128xf32>
    %cst_48 = arith.constant 1.000000e-01 : f32
    %165 = vector.broadcast %cst_48 : f32 to vector<16x128xf32>
    %166 = arith.mulf %165, %162 : vector<16x128xf32>
    %167 = arith.select %164, %162, %166 : vector<16x128xi1>, vector<16x128xf32>
    %c2_49 = arith.constant 2 : index
    %c0_50 = arith.constant 0 : index
    %c0_51 = arith.constant 0 : index
    %168 = vector.load %arg4[%c2_49, %c0_50, %c0_51] : memref<16x16x128xf32, #tpu.memory_space<vmem>>, vector<1x16x128xf32>
    %169 = vector.shape_cast %168 : vector<1x16x128xf32> to vector<16x128xf32>
    %170 = vector.shape_cast %167 : vector<16x128xf32> to vector<1x16x128xf32>
    tpu.vector_store %arg4[%c2_49, %c0_50, %c0_51], %170 {strides = array<i32>} : memref<16x16x128xf32, #tpu.memory_space<vmem>>, vector<1x16x128xf32>,
    %c3_52 = arith.constant 3 : index
    %c0_53 = arith.constant 0 : index
    %c0_54 = arith.constant 0 : index
    %171 = vector.load %arg1[%c3_52, %c0_53, %c0_54] : memref<18x18x128xf32, #tpu.memory_space<vmem>>, vector<1x18x128xf32>
    %172 = vector.shape_cast %171 : vector<1x18x128xf32> to vector<18x128xf32>
    %173 = vector.extract_strided_slice %172 {offsets = [0, 0], sizes = [16, 128], strides = [1, 1]} : vector<18x128xf32> to vector<16x128xf32>
    %174 = arith.mulf %173, %4 : vector<16x128xf32>
    %175 = arith.addf %47, %174 : vector<16x128xf32>
    %176 = vector.extract_strided_slice %172 {offsets = [1, 0], sizes = [16, 128], strides = [1, 1]} : vector<18x128xf32> to vector<16x128xf32>
    %177 = arith.mulf %176, %9 : vector<16x128xf32>
    %178 = arith.addf %175, %177 : vector<16x128xf32>
    %179 = vector.extract_strided_slice %172 {offsets = [2, 0], sizes = [16, 128], strides = [1, 1]} : vector<18x128xf32> to vector<16x128xf32>
    %180 = arith.mulf %179, %14 : vector<16x128xf32>
    %181 = arith.addf %178, %180 : vector<16x128xf32>
    %c4_55 = arith.constant 4 : index
    %c0_56 = arith.constant 0 : index
    %c0_57 = arith.constant 0 : index
    %182 = vector.load %arg1[%c4_55, %c0_56, %c0_57] : memref<18x18x128xf32, #tpu.memory_space<vmem>>, vector<1x18x128xf32>
    %183 = vector.shape_cast %182 : vector<1x18x128xf32> to vector<18x128xf32>
    %184 = vector.extract_strided_slice %183 {offsets = [0, 0], sizes = [16, 128], strides = [1, 1]} : vector<18x128xf32> to vector<16x128xf32>
    %185 = arith.mulf %184, %19 : vector<16x128xf32>
    %186 = arith.addf %181, %185 : vector<16x128xf32>
    %187 = vector.extract_strided_slice %183 {offsets = [1, 0], sizes = [16, 128], strides = [1, 1]} : vector<18x128xf32> to vector<16x128xf32>
    %188 = arith.mulf %187, %24 : vector<16x128xf32>
    %189 = arith.addf %186, %188 : vector<16x128xf32>
    %190 = vector.extract_strided_slice %183 {offsets = [2, 0], sizes = [16, 128], strides = [1, 1]} : vector<18x128xf32> to vector<16x128xf32>
    %191 = arith.mulf %190, %29 : vector<16x128xf32>
    %192 = arith.addf %189, %191 : vector<16x128xf32>
    %c5_58 = arith.constant 5 : index
    %c0_59 = arith.constant 0 : index
    %c0_60 = arith.constant 0 : index
    %193 = vector.load %arg1[%c5_58, %c0_59, %c0_60] : memref<18x18x128xf32, #tpu.memory_space<vmem>>, vector<1x18x128xf32>
    %194 = vector.shape_cast %193 : vector<1x18x128xf32> to vector<18x128xf32>
    %195 = vector.extract_strided_slice %194 {offsets = [0, 0], sizes = [16, 128], strides = [1, 1]} : vector<18x128xf32> to vector<16x128xf32>
    %196 = arith.mulf %195, %34 : vector<16x128xf32>
    %197 = arith.addf %192, %196 : vector<16x128xf32>
    %198 = vector.extract_strided_slice %194 {offsets = [1, 0], sizes = [16, 128], strides = [1, 1]} : vector<18x128xf32> to vector<16x128xf32>
    %199 = arith.mulf %198, %39 : vector<16x128xf32>
    %200 = arith.addf %197, %199 : vector<16x128xf32>
    %201 = vector.extract_strided_slice %194 {offsets = [2, 0], sizes = [16, 128], strides = [1, 1]} : vector<18x128xf32> to vector<16x128xf32>
    %202 = arith.mulf %201, %44 : vector<16x128xf32>
    %203 = arith.addf %200, %202 : vector<16x128xf32>
    %cst_61 = arith.constant 0.000000e+00 : f32
    %204 = vector.broadcast %cst_61 : f32 to vector<16x128xf32>
    %205 = arith.cmpf oge, %203, %204 : vector<16x128xf32>
    %cst_62 = arith.constant 1.000000e-01 : f32
    %206 = vector.broadcast %cst_62 : f32 to vector<16x128xf32>
    %207 = arith.mulf %206, %203 : vector<16x128xf32>
    %208 = arith.select %205, %203, %207 : vector<16x128xi1>, vector<16x128xf32>
    %c3_63 = arith.constant 3 : index
    %c0_64 = arith.constant 0 : index
    %c0_65 = arith.constant 0 : index
    %209 = vector.load %arg4[%c3_63, %c0_64, %c0_65] : memref<16x16x128xf32, #tpu.memory_space<vmem>>, vector<1x16x128xf32>
    %210 = vector.shape_cast %209 : vector<1x16x128xf32> to vector<16x128xf32>
    %211 = vector.shape_cast %208 : vector<16x128xf32> to vector<1x16x128xf32>
    tpu.vector_store %arg4[%c3_63, %c0_64, %c0_65], %211 {strides = array<i32>} : memref<16x16x128xf32, #tpu.memory_space<vmem>>, vector<1x16x128xf32>,
    %c4_66 = arith.constant 4 : index
    %c0_67 = arith.constant 0 : index
    %c0_68 = arith.constant 0 : index
    %212 = vector.load %arg1[%c4_66, %c0_67, %c0_68] : memref<18x18x128xf32, #tpu.memory_space<vmem>>, vector<1x18x128xf32>
    %213 = vector.shape_cast %212 : vector<1x18x128xf32> to vector<18x128xf32>
    %214 = vector.extract_strided_slice %213 {offsets = [0, 0], sizes = [16, 128], strides = [1, 1]} : vector<18x128xf32> to vector<16x128xf32>
    %215 = arith.mulf %214, %4 : vector<16x128xf32>
    %216 = arith.addf %47, %215 : vector<16x128xf32>
    %217 = vector.extract_strided_slice %213 {offsets = [1, 0], sizes = [16, 128], strides = [1, 1]} : vector<18x128xf32> to vector<16x128xf32>
    %218 = arith.mulf %217, %9 : vector<16x128xf32>
    %219 = arith.addf %216, %218 : vector<16x128xf32>
    %220 = vector.extract_strided_slice %213 {offsets = [2, 0], sizes = [16, 128], strides = [1, 1]} : vector<18x128xf32> to vector<16x128xf32>
    %221 = arith.mulf %220, %14 : vector<16x128xf32>
    %222 = arith.addf %219, %221 : vector<16x128xf32>
    %c5_69 = arith.constant 5 : index
    %c0_70 = arith.constant 0 : index
    %c0_71 = arith.constant 0 : index
    %223 = vector.load %arg1[%c5_69, %c0_70, %c0_71] : memref<18x18x128xf32, #tpu.memory_space<vmem>>, vector<1x18x128xf32>
    %224 = vector.shape_cast %223 : vector<1x18x128xf32> to vector<18x128xf32>
    %225 = vector.extract_strided_slice %224 {offsets = [0, 0], sizes = [16, 128], strides = [1, 1]} : vector<18x128xf32> to vector<16x128xf32>
    %226 = arith.mulf %225, %19 : vector<16x128xf32>
    %227 = arith.addf %222, %226 : vector<16x128xf32>
    %228 = vector.extract_strided_slice %224 {offsets = [1, 0], sizes = [16, 128], strides = [1, 1]} : vector<18x128xf32> to vector<16x128xf32>
    %229 = arith.mulf %228, %24 : vector<16x128xf32>
    %230 = arith.addf %227, %229 : vector<16x128xf32>
    %231 = vector.extract_strided_slice %224 {offsets = [2, 0], sizes = [16, 128], strides = [1, 1]} : vector<18x128xf32> to vector<16x128xf32>
    %232 = arith.mulf %231, %29 : vector<16x128xf32>
    %233 = arith.addf %230, %232 : vector<16x128xf32>
    %c6_72 = arith.constant 6 : index
    %c0_73 = arith.constant 0 : index
    %c0_74 = arith.constant 0 : index
    %234 = vector.load %arg1[%c6_72, %c0_73, %c0_74] : memref<18x18x128xf32, #tpu.memory_space<vmem>>, vector<1x18x128xf32>
    %235 = vector.shape_cast %234 : vector<1x18x128xf32> to vector<18x128xf32>
    %236 = vector.extract_strided_slice %235 {offsets = [0, 0], sizes = [16, 128], strides = [1, 1]} : vector<18x128xf32> to vector<16x128xf32>
    %237 = arith.mulf %236, %34 : vector<16x128xf32>
    %238 = arith.addf %233, %237 : vector<16x128xf32>
    %239 = vector.extract_strided_slice %235 {offsets = [1, 0], sizes = [16, 128], strides = [1, 1]} : vector<18x128xf32> to vector<16x128xf32>
    %240 = arith.mulf %239, %39 : vector<16x128xf32>
    %241 = arith.addf %238, %240 : vector<16x128xf32>
    %242 = vector.extract_strided_slice %235 {offsets = [2, 0], sizes = [16, 128], strides = [1, 1]} : vector<18x128xf32> to vector<16x128xf32>
    %243 = arith.mulf %242, %44 : vector<16x128xf32>
    %244 = arith.addf %241, %243 : vector<16x128xf32>
    %cst_75 = arith.constant 0.000000e+00 : f32
    %245 = vector.broadcast %cst_75 : f32 to vector<16x128xf32>
    %246 = arith.cmpf oge, %244, %245 : vector<16x128xf32>
    %cst_76 = arith.constant 1.000000e-01 : f32
    %247 = vector.broadcast %cst_76 : f32 to vector<16x128xf32>
    %248 = arith.mulf %247, %244 : vector<16x128xf32>
    %249 = arith.select %246, %244, %248 : vector<16x128xi1>, vector<16x128xf32>
    %c4_77 = arith.constant 4 : index
    %c0_78 = arith.constant 0 : index
    %c0_79 = arith.constant 0 : index
    %250 = vector.load %arg4[%c4_77, %c0_78, %c0_79] : memref<16x16x128xf32, #tpu.memory_space<vmem>>, vector<1x16x128xf32>
    %251 = vector.shape_cast %250 : vector<1x16x128xf32> to vector<16x128xf32>
    %252 = vector.shape_cast %249 : vector<16x128xf32> to vector<1x16x128xf32>
    tpu.vector_store %arg4[%c4_77, %c0_78, %c0_79], %252 {strides = array<i32>} : memref<16x16x128xf32, #tpu.memory_space<vmem>>, vector<1x16x128xf32>,
    %c5_80 = arith.constant 5 : index
    %c0_81 = arith.constant 0 : index
    %c0_82 = arith.constant 0 : index
    %253 = vector.load %arg1[%c5_80, %c0_81, %c0_82] : memref<18x18x128xf32, #tpu.memory_space<vmem>>, vector<1x18x128xf32>
    %254 = vector.shape_cast %253 : vector<1x18x128xf32> to vector<18x128xf32>
    %255 = vector.extract_strided_slice %254 {offsets = [0, 0], sizes = [16, 128], strides = [1, 1]} : vector<18x128xf32> to vector<16x128xf32>
    %256 = arith.mulf %255, %4 : vector<16x128xf32>
    %257 = arith.addf %47, %256 : vector<16x128xf32>
    %258 = vector.extract_strided_slice %254 {offsets = [1, 0], sizes = [16, 128], strides = [1, 1]} : vector<18x128xf32> to vector<16x128xf32>
    %259 = arith.mulf %258, %9 : vector<16x128xf32>
    %260 = arith.addf %257, %259 : vector<16x128xf32>
    %261 = vector.extract_strided_slice %254 {offsets = [2, 0], sizes = [16, 128], strides = [1, 1]} : vector<18x128xf32> to vector<16x128xf32>
    %262 = arith.mulf %261, %14 : vector<16x128xf32>
    %263 = arith.addf %260, %262 : vector<16x128xf32>
    %c6_83 = arith.constant 6 : index
    %c0_84 = arith.constant 0 : index
    %c0_85 = arith.constant 0 : index
    %264 = vector.load %arg1[%c6_83, %c0_84, %c0_85] : memref<18x18x128xf32, #tpu.memory_space<vmem>>, vector<1x18x128xf32>
    %265 = vector.shape_cast %264 : vector<1x18x128xf32> to vector<18x128xf32>
    %266 = vector.extract_strided_slice %265 {offsets = [0, 0], sizes = [16, 128], strides = [1, 1]} : vector<18x128xf32> to vector<16x128xf32>
    %267 = arith.mulf %266, %19 : vector<16x128xf32>
    %268 = arith.addf %263, %267 : vector<16x128xf32>
    %269 = vector.extract_strided_slice %265 {offsets = [1, 0], sizes = [16, 128], strides = [1, 1]} : vector<18x128xf32> to vector<16x128xf32>
    %270 = arith.mulf %269, %24 : vector<16x128xf32>
    %271 = arith.addf %268, %270 : vector<16x128xf32>
    %272 = vector.extract_strided_slice %265 {offsets = [2, 0], sizes = [16, 128], strides = [1, 1]} : vector<18x128xf32> to vector<16x128xf32>
    %273 = arith.mulf %272, %29 : vector<16x128xf32>
    %274 = arith.addf %271, %273 : vector<16x128xf32>
    %c7_86 = arith.constant 7 : index
    %c0_87 = arith.constant 0 : index
    %c0_88 = arith.constant 0 : index
    %275 = vector.load %arg1[%c7_86, %c0_87, %c0_88] : memref<18x18x128xf32, #tpu.memory_space<vmem>>, vector<1x18x128xf32>
    %276 = vector.shape_cast %275 : vector<1x18x128xf32> to vector<18x128xf32>
    %277 = vector.extract_strided_slice %276 {offsets = [0, 0], sizes = [16, 128], strides = [1, 1]} : vector<18x128xf32> to vector<16x128xf32>
    %278 = arith.mulf %277, %34 : vector<16x128xf32>
    %279 = arith.addf %274, %278 : vector<16x128xf32>
    %280 = vector.extract_strided_slice %276 {offsets = [1, 0], sizes = [16, 128], strides = [1, 1]} : vector<18x128xf32> to vector<16x128xf32>
    %281 = arith.mulf %280, %39 : vector<16x128xf32>
    %282 = arith.addf %279, %281 : vector<16x128xf32>
    %283 = vector.extract_strided_slice %276 {offsets = [2, 0], sizes = [16, 128], strides = [1, 1]} : vector<18x128xf32> to vector<16x128xf32>
    %284 = arith.mulf %283, %44 : vector<16x128xf32>
    %285 = arith.addf %282, %284 : vector<16x128xf32>
    %cst_89 = arith.constant 0.000000e+00 : f32
    %286 = vector.broadcast %cst_89 : f32 to vector<16x128xf32>
    %287 = arith.cmpf oge, %285, %286 : vector<16x128xf32>
    %cst_90 = arith.constant 1.000000e-01 : f32
    %288 = vector.broadcast %cst_90 : f32 to vector<16x128xf32>
    %289 = arith.mulf %288, %285 : vector<16x128xf32>
    %290 = arith.select %287, %285, %289 : vector<16x128xi1>, vector<16x128xf32>
    %c5_91 = arith.constant 5 : index
    %c0_92 = arith.constant 0 : index
    %c0_93 = arith.constant 0 : index
    %291 = vector.load %arg4[%c5_91, %c0_92, %c0_93] : memref<16x16x128xf32, #tpu.memory_space<vmem>>, vector<1x16x128xf32>
    %292 = vector.shape_cast %291 : vector<1x16x128xf32> to vector<16x128xf32>
    %293 = vector.shape_cast %290 : vector<16x128xf32> to vector<1x16x128xf32>
    tpu.vector_store %arg4[%c5_91, %c0_92, %c0_93], %293 {strides = array<i32>} : memref<16x16x128xf32, #tpu.memory_space<vmem>>, vector<1x16x128xf32>,
    %c6_94 = arith.constant 6 : index
    %c0_95 = arith.constant 0 : index
    %c0_96 = arith.constant 0 : index
    %294 = vector.load %arg1[%c6_94, %c0_95, %c0_96] : memref<18x18x128xf32, #tpu.memory_space<vmem>>, vector<1x18x128xf32>
    %295 = vector.shape_cast %294 : vector<1x18x128xf32> to vector<18x128xf32>
    %296 = vector.extract_strided_slice %295 {offsets = [0, 0], sizes = [16, 128], strides = [1, 1]} : vector<18x128xf32> to vector<16x128xf32>
    %297 = arith.mulf %296, %4 : vector<16x128xf32>
    %298 = arith.addf %47, %297 : vector<16x128xf32>
    %299 = vector.extract_strided_slice %295 {offsets = [1, 0], sizes = [16, 128], strides = [1, 1]} : vector<18x128xf32> to vector<16x128xf32>
    %300 = arith.mulf %299, %9 : vector<16x128xf32>
    %301 = arith.addf %298, %300 : vector<16x128xf32>
    %302 = vector.extract_strided_slice %295 {offsets = [2, 0], sizes = [16, 128], strides = [1, 1]} : vector<18x128xf32> to vector<16x128xf32>
    %303 = arith.mulf %302, %14 : vector<16x128xf32>
    %304 = arith.addf %301, %303 : vector<16x128xf32>
    %c7_97 = arith.constant 7 : index
    %c0_98 = arith.constant 0 : index
    %c0_99 = arith.constant 0 : index
    %305 = vector.load %arg1[%c7_97, %c0_98, %c0_99] : memref<18x18x128xf32, #tpu.memory_space<vmem>>, vector<1x18x128xf32>
    %306 = vector.shape_cast %305 : vector<1x18x128xf32> to vector<18x128xf32>
    %307 = vector.extract_strided_slice %306 {offsets = [0, 0], sizes = [16, 128], strides = [1, 1]} : vector<18x128xf32> to vector<16x128xf32>
    %308 = arith.mulf %307, %19 : vector<16x128xf32>
    %309 = arith.addf %304, %308 : vector<16x128xf32>
    %310 = vector.extract_strided_slice %306 {offsets = [1, 0], sizes = [16, 128], strides = [1, 1]} : vector<18x128xf32> to vector<16x128xf32>
    %311 = arith.mulf %310, %24 : vector<16x128xf32>
    %312 = arith.addf %309, %311 : vector<16x128xf32>
    %313 = vector.extract_strided_slice %306 {offsets = [2, 0], sizes = [16, 128], strides = [1, 1]} : vector<18x128xf32> to vector<16x128xf32>
    %314 = arith.mulf %313, %29 : vector<16x128xf32>
    %315 = arith.addf %312, %314 : vector<16x128xf32>
    %c8_100 = arith.constant 8 : index
    %c0_101 = arith.constant 0 : index
    %c0_102 = arith.constant 0 : index
    %316 = vector.load %arg1[%c8_100, %c0_101, %c0_102] : memref<18x18x128xf32, #tpu.memory_space<vmem>>, vector<1x18x128xf32>
    %317 = vector.shape_cast %316 : vector<1x18x128xf32> to vector<18x128xf32>
    %318 = vector.extract_strided_slice %317 {offsets = [0, 0], sizes = [16, 128], strides = [1, 1]} : vector<18x128xf32> to vector<16x128xf32>
    %319 = arith.mulf %318, %34 : vector<16x128xf32>
    %320 = arith.addf %315, %319 : vector<16x128xf32>
    %321 = vector.extract_strided_slice %317 {offsets = [1, 0], sizes = [16, 128], strides = [1, 1]} : vector<18x128xf32> to vector<16x128xf32>
    %322 = arith.mulf %321, %39 : vector<16x128xf32>
    %323 = arith.addf %320, %322 : vector<16x128xf32>
    %324 = vector.extract_strided_slice %317 {offsets = [2, 0], sizes = [16, 128], strides = [1, 1]} : vector<18x128xf32> to vector<16x128xf32>
    %325 = arith.mulf %324, %44 : vector<16x128xf32>
    %326 = arith.addf %323, %325 : vector<16x128xf32>
    %cst_103 = arith.constant 0.000000e+00 : f32
    %327 = vector.broadcast %cst_103 : f32 to vector<16x128xf32>
    %328 = arith.cmpf oge, %326, %327 : vector<16x128xf32>
    %cst_104 = arith.constant 1.000000e-01 : f32
    %329 = vector.broadcast %cst_104 : f32 to vector<16x128xf32>
    %330 = arith.mulf %329, %326 : vector<16x128xf32>
    %331 = arith.select %328, %326, %330 : vector<16x128xi1>, vector<16x128xf32>
    %c6_105 = arith.constant 6 : index
    %c0_106 = arith.constant 0 : index
    %c0_107 = arith.constant 0 : index
    %332 = vector.load %arg4[%c6_105, %c0_106, %c0_107] : memref<16x16x128xf32, #tpu.memory_space<vmem>>, vector<1x16x128xf32>
    %333 = vector.shape_cast %332 : vector<1x16x128xf32> to vector<16x128xf32>
    %334 = vector.shape_cast %331 : vector<16x128xf32> to vector<1x16x128xf32>
    tpu.vector_store %arg4[%c6_105, %c0_106, %c0_107], %334 {strides = array<i32>} : memref<16x16x128xf32, #tpu.memory_space<vmem>>, vector<1x16x128xf32>,
    %c7_108 = arith.constant 7 : index
    %c0_109 = arith.constant 0 : index
    %c0_110 = arith.constant 0 : index
    %335 = vector.load %arg1[%c7_108, %c0_109, %c0_110] : memref<18x18x128xf32, #tpu.memory_space<vmem>>, vector<1x18x128xf32>
    %336 = vector.shape_cast %335 : vector<1x18x128xf32> to vector<18x128xf32>
    %337 = vector.extract_strided_slice %336 {offsets = [0, 0], sizes = [16, 128], strides = [1, 1]} : vector<18x128xf32> to vector<16x128xf32>
    %338 = arith.mulf %337, %4 : vector<16x128xf32>
    %339 = arith.addf %47, %338 : vector<16x128xf32>
    %340 = vector.extract_strided_slice %336 {offsets = [1, 0], sizes = [16, 128], strides = [1, 1]} : vector<18x128xf32> to vector<16x128xf32>
    %341 = arith.mulf %340, %9 : vector<16x128xf32>
    %342 = arith.addf %339, %341 : vector<16x128xf32>
    %343 = vector.extract_strided_slice %336 {offsets = [2, 0], sizes = [16, 128], strides = [1, 1]} : vector<18x128xf32> to vector<16x128xf32>
    %344 = arith.mulf %343, %14 : vector<16x128xf32>
    %345 = arith.addf %342, %344 : vector<16x128xf32>
    %c8_111 = arith.constant 8 : index
    %c0_112 = arith.constant 0 : index
    %c0_113 = arith.constant 0 : index
    %346 = vector.load %arg1[%c8_111, %c0_112, %c0_113] : memref<18x18x128xf32, #tpu.memory_space<vmem>>, vector<1x18x128xf32>
    %347 = vector.shape_cast %346 : vector<1x18x128xf32> to vector<18x128xf32>
    %348 = vector.extract_strided_slice %347 {offsets = [0, 0], sizes = [16, 128], strides = [1, 1]} : vector<18x128xf32> to vector<16x128xf32>
    %349 = arith.mulf %348, %19 : vector<16x128xf32>
    %350 = arith.addf %345, %349 : vector<16x128xf32>
    %351 = vector.extract_strided_slice %347 {offsets = [1, 0], sizes = [16, 128], strides = [1, 1]} : vector<18x128xf32> to vector<16x128xf32>
    %352 = arith.mulf %351, %24 : vector<16x128xf32>
    %353 = arith.addf %350, %352 : vector<16x128xf32>
    %354 = vector.extract_strided_slice %347 {offsets = [2, 0], sizes = [16, 128], strides = [1, 1]} : vector<18x128xf32> to vector<16x128xf32>
    %355 = arith.mulf %354, %29 : vector<16x128xf32>
    %356 = arith.addf %353, %355 : vector<16x128xf32>
    %c9 = arith.constant 9 : index
    %c0_114 = arith.constant 0 : index
    %c0_115 = arith.constant 0 : index
    %357 = vector.load %arg1[%c9, %c0_114, %c0_115] : memref<18x18x128xf32, #tpu.memory_space<vmem>>, vector<1x18x128xf32>
    %358 = vector.shape_cast %357 : vector<1x18x128xf32> to vector<18x128xf32>
    %359 = vector.extract_strided_slice %358 {offsets = [0, 0], sizes = [16, 128], strides = [1, 1]} : vector<18x128xf32> to vector<16x128xf32>
    %360 = arith.mulf %359, %34 : vector<16x128xf32>
    %361 = arith.addf %356, %360 : vector<16x128xf32>
    %362 = vector.extract_strided_slice %358 {offsets = [1, 0], sizes = [16, 128], strides = [1, 1]} : vector<18x128xf32> to vector<16x128xf32>
    %363 = arith.mulf %362, %39 : vector<16x128xf32>
    %364 = arith.addf %361, %363 : vector<16x128xf32>
    %365 = vector.extract_strided_slice %358 {offsets = [2, 0], sizes = [16, 128], strides = [1, 1]} : vector<18x128xf32> to vector<16x128xf32>
    %366 = arith.mulf %365, %44 : vector<16x128xf32>
    %367 = arith.addf %364, %366 : vector<16x128xf32>
    %cst_116 = arith.constant 0.000000e+00 : f32
    %368 = vector.broadcast %cst_116 : f32 to vector<16x128xf32>
    %369 = arith.cmpf oge, %367, %368 : vector<16x128xf32>
    %cst_117 = arith.constant 1.000000e-01 : f32
    %370 = vector.broadcast %cst_117 : f32 to vector<16x128xf32>
    %371 = arith.mulf %370, %367 : vector<16x128xf32>
    %372 = arith.select %369, %367, %371 : vector<16x128xi1>, vector<16x128xf32>
    %c7_118 = arith.constant 7 : index
    %c0_119 = arith.constant 0 : index
    %c0_120 = arith.constant 0 : index
    %373 = vector.load %arg4[%c7_118, %c0_119, %c0_120] : memref<16x16x128xf32, #tpu.memory_space<vmem>>, vector<1x16x128xf32>
    %374 = vector.shape_cast %373 : vector<1x16x128xf32> to vector<16x128xf32>
    %375 = vector.shape_cast %372 : vector<16x128xf32> to vector<1x16x128xf32>
    tpu.vector_store %arg4[%c7_118, %c0_119, %c0_120], %375 {strides = array<i32>} : memref<16x16x128xf32, #tpu.memory_space<vmem>>, vector<1x16x128xf32>,
    %c8_121 = arith.constant 8 : index
    %c0_122 = arith.constant 0 : index
    %c0_123 = arith.constant 0 : index
    %376 = vector.load %arg1[%c8_121, %c0_122, %c0_123] : memref<18x18x128xf32, #tpu.memory_space<vmem>>, vector<1x18x128xf32>
    %377 = vector.shape_cast %376 : vector<1x18x128xf32> to vector<18x128xf32>
    %378 = vector.extract_strided_slice %377 {offsets = [0, 0], sizes = [16, 128], strides = [1, 1]} : vector<18x128xf32> to vector<16x128xf32>
    %379 = arith.mulf %378, %4 : vector<16x128xf32>
    %380 = arith.addf %47, %379 : vector<16x128xf32>
    %381 = vector.extract_strided_slice %377 {offsets = [1, 0], sizes = [16, 128], strides = [1, 1]} : vector<18x128xf32> to vector<16x128xf32>
    %382 = arith.mulf %381, %9 : vector<16x128xf32>
    %383 = arith.addf %380, %382 : vector<16x128xf32>
    %384 = vector.extract_strided_slice %377 {offsets = [2, 0], sizes = [16, 128], strides = [1, 1]} : vector<18x128xf32> to vector<16x128xf32>
    %385 = arith.mulf %384, %14 : vector<16x128xf32>
    %386 = arith.addf %383, %385 : vector<16x128xf32>
    %c9_124 = arith.constant 9 : index
    %c0_125 = arith.constant 0 : index
    %c0_126 = arith.constant 0 : index
    %387 = vector.load %arg1[%c9_124, %c0_125, %c0_126] : memref<18x18x128xf32, #tpu.memory_space<vmem>>, vector<1x18x128xf32>
    %388 = vector.shape_cast %387 : vector<1x18x128xf32> to vector<18x128xf32>
    %389 = vector.extract_strided_slice %388 {offsets = [0, 0], sizes = [16, 128], strides = [1, 1]} : vector<18x128xf32> to vector<16x128xf32>
    %390 = arith.mulf %389, %19 : vector<16x128xf32>
    %391 = arith.addf %386, %390 : vector<16x128xf32>
    %392 = vector.extract_strided_slice %388 {offsets = [1, 0], sizes = [16, 128], strides = [1, 1]} : vector<18x128xf32> to vector<16x128xf32>
    %393 = arith.mulf %392, %24 : vector<16x128xf32>
    %394 = arith.addf %391, %393 : vector<16x128xf32>
    %395 = vector.extract_strided_slice %388 {offsets = [2, 0], sizes = [16, 128], strides = [1, 1]} : vector<18x128xf32> to vector<16x128xf32>
    %396 = arith.mulf %395, %29 : vector<16x128xf32>
    %397 = arith.addf %394, %396 : vector<16x128xf32>
    %c10 = arith.constant 10 : index
    %c0_127 = arith.constant 0 : index
    %c0_128 = arith.constant 0 : index
    %398 = vector.load %arg1[%c10, %c0_127, %c0_128] : memref<18x18x128xf32, #tpu.memory_space<vmem>>, vector<1x18x128xf32>
    %399 = vector.shape_cast %398 : vector<1x18x128xf32> to vector<18x128xf32>
    %400 = vector.extract_strided_slice %399 {offsets = [0, 0], sizes = [16, 128], strides = [1, 1]} : vector<18x128xf32> to vector<16x128xf32>
    %401 = arith.mulf %400, %34 : vector<16x128xf32>
    %402 = arith.addf %397, %401 : vector<16x128xf32>
    %403 = vector.extract_strided_slice %399 {offsets = [1, 0], sizes = [16, 128], strides = [1, 1]} : vector<18x128xf32> to vector<16x128xf32>
    %404 = arith.mulf %403, %39 : vector<16x128xf32>
    %405 = arith.addf %402, %404 : vector<16x128xf32>
    %406 = vector.extract_strided_slice %399 {offsets = [2, 0], sizes = [16, 128], strides = [1, 1]} : vector<18x128xf32> to vector<16x128xf32>
    %407 = arith.mulf %406, %44 : vector<16x128xf32>
    %408 = arith.addf %405, %407 : vector<16x128xf32>
    %cst_129 = arith.constant 0.000000e+00 : f32
    %409 = vector.broadcast %cst_129 : f32 to vector<16x128xf32>
    %410 = arith.cmpf oge, %408, %409 : vector<16x128xf32>
    %cst_130 = arith.constant 1.000000e-01 : f32
    %411 = vector.broadcast %cst_130 : f32 to vector<16x128xf32>
    %412 = arith.mulf %411, %408 : vector<16x128xf32>
    %413 = arith.select %410, %408, %412 : vector<16x128xi1>, vector<16x128xf32>
    %c8_131 = arith.constant 8 : index
    %c0_132 = arith.constant 0 : index
    %c0_133 = arith.constant 0 : index
    %414 = vector.load %arg4[%c8_131, %c0_132, %c0_133] : memref<16x16x128xf32, #tpu.memory_space<vmem>>, vector<1x16x128xf32>
    %415 = vector.shape_cast %414 : vector<1x16x128xf32> to vector<16x128xf32>
    %416 = vector.shape_cast %413 : vector<16x128xf32> to vector<1x16x128xf32>
    tpu.vector_store %arg4[%c8_131, %c0_132, %c0_133], %416 {strides = array<i32>} : memref<16x16x128xf32, #tpu.memory_space<vmem>>, vector<1x16x128xf32>,
    %c9_134 = arith.constant 9 : index
    %c0_135 = arith.constant 0 : index
    %c0_136 = arith.constant 0 : index
    %417 = vector.load %arg1[%c9_134, %c0_135, %c0_136] : memref<18x18x128xf32, #tpu.memory_space<vmem>>, vector<1x18x128xf32>
    %418 = vector.shape_cast %417 : vector<1x18x128xf32> to vector<18x128xf32>
    %419 = vector.extract_strided_slice %418 {offsets = [0, 0], sizes = [16, 128], strides = [1, 1]} : vector<18x128xf32> to vector<16x128xf32>
    %420 = arith.mulf %419, %4 : vector<16x128xf32>
    %421 = arith.addf %47, %420 : vector<16x128xf32>
    %422 = vector.extract_strided_slice %418 {offsets = [1, 0], sizes = [16, 128], strides = [1, 1]} : vector<18x128xf32> to vector<16x128xf32>
    %423 = arith.mulf %422, %9 : vector<16x128xf32>
    %424 = arith.addf %421, %423 : vector<16x128xf32>
    %425 = vector.extract_strided_slice %418 {offsets = [2, 0], sizes = [16, 128], strides = [1, 1]} : vector<18x128xf32> to vector<16x128xf32>
    %426 = arith.mulf %425, %14 : vector<16x128xf32>
    %427 = arith.addf %424, %426 : vector<16x128xf32>
    %c10_137 = arith.constant 10 : index
    %c0_138 = arith.constant 0 : index
    %c0_139 = arith.constant 0 : index
    %428 = vector.load %arg1[%c10_137, %c0_138, %c0_139] : memref<18x18x128xf32, #tpu.memory_space<vmem>>, vector<1x18x128xf32>
    %429 = vector.shape_cast %428 : vector<1x18x128xf32> to vector<18x128xf32>
    %430 = vector.extract_strided_slice %429 {offsets = [0, 0], sizes = [16, 128], strides = [1, 1]} : vector<18x128xf32> to vector<16x128xf32>
    %431 = arith.mulf %430, %19 : vector<16x128xf32>
    %432 = arith.addf %427, %431 : vector<16x128xf32>
    %433 = vector.extract_strided_slice %429 {offsets = [1, 0], sizes = [16, 128], strides = [1, 1]} : vector<18x128xf32> to vector<16x128xf32>
    %434 = arith.mulf %433, %24 : vector<16x128xf32>
    %435 = arith.addf %432, %434 : vector<16x128xf32>
    %436 = vector.extract_strided_slice %429 {offsets = [2, 0], sizes = [16, 128], strides = [1, 1]} : vector<18x128xf32> to vector<16x128xf32>
    %437 = arith.mulf %436, %29 : vector<16x128xf32>
    %438 = arith.addf %435, %437 : vector<16x128xf32>
    %c11 = arith.constant 11 : index
    %c0_140 = arith.constant 0 : index
    %c0_141 = arith.constant 0 : index
    %439 = vector.load %arg1[%c11, %c0_140, %c0_141] : memref<18x18x128xf32, #tpu.memory_space<vmem>>, vector<1x18x128xf32>
    %440 = vector.shape_cast %439 : vector<1x18x128xf32> to vector<18x128xf32>
    %441 = vector.extract_strided_slice %440 {offsets = [0, 0], sizes = [16, 128], strides = [1, 1]} : vector<18x128xf32> to vector<16x128xf32>
    %442 = arith.mulf %441, %34 : vector<16x128xf32>
    %443 = arith.addf %438, %442 : vector<16x128xf32>
    %444 = vector.extract_strided_slice %440 {offsets = [1, 0], sizes = [16, 128], strides = [1, 1]} : vector<18x128xf32> to vector<16x128xf32>
    %445 = arith.mulf %444, %39 : vector<16x128xf32>
    %446 = arith.addf %443, %445 : vector<16x128xf32>
    %447 = vector.extract_strided_slice %440 {offsets = [2, 0], sizes = [16, 128], strides = [1, 1]} : vector<18x128xf32> to vector<16x128xf32>
    %448 = arith.mulf %447, %44 : vector<16x128xf32>
    %449 = arith.addf %446, %448 : vector<16x128xf32>
    %cst_142 = arith.constant 0.000000e+00 : f32
    %450 = vector.broadcast %cst_142 : f32 to vector<16x128xf32>
    %451 = arith.cmpf oge, %449, %450 : vector<16x128xf32>
    %cst_143 = arith.constant 1.000000e-01 : f32
    %452 = vector.broadcast %cst_143 : f32 to vector<16x128xf32>
    %453 = arith.mulf %452, %449 : vector<16x128xf32>
    %454 = arith.select %451, %449, %453 : vector<16x128xi1>, vector<16x128xf32>
    %c9_144 = arith.constant 9 : index
    %c0_145 = arith.constant 0 : index
    %c0_146 = arith.constant 0 : index
    %455 = vector.load %arg4[%c9_144, %c0_145, %c0_146] : memref<16x16x128xf32, #tpu.memory_space<vmem>>, vector<1x16x128xf32>
    %456 = vector.shape_cast %455 : vector<1x16x128xf32> to vector<16x128xf32>
    %457 = vector.shape_cast %454 : vector<16x128xf32> to vector<1x16x128xf32>
    tpu.vector_store %arg4[%c9_144, %c0_145, %c0_146], %457 {strides = array<i32>} : memref<16x16x128xf32, #tpu.memory_space<vmem>>, vector<1x16x128xf32>,
    %c10_147 = arith.constant 10 : index
    %c0_148 = arith.constant 0 : index
    %c0_149 = arith.constant 0 : index
    %458 = vector.load %arg1[%c10_147, %c0_148, %c0_149] : memref<18x18x128xf32, #tpu.memory_space<vmem>>, vector<1x18x128xf32>
    %459 = vector.shape_cast %458 : vector<1x18x128xf32> to vector<18x128xf32>
    %460 = vector.extract_strided_slice %459 {offsets = [0, 0], sizes = [16, 128], strides = [1, 1]} : vector<18x128xf32> to vector<16x128xf32>
    %461 = arith.mulf %460, %4 : vector<16x128xf32>
    %462 = arith.addf %47, %461 : vector<16x128xf32>
    %463 = vector.extract_strided_slice %459 {offsets = [1, 0], sizes = [16, 128], strides = [1, 1]} : vector<18x128xf32> to vector<16x128xf32>
    %464 = arith.mulf %463, %9 : vector<16x128xf32>
    %465 = arith.addf %462, %464 : vector<16x128xf32>
    %466 = vector.extract_strided_slice %459 {offsets = [2, 0], sizes = [16, 128], strides = [1, 1]} : vector<18x128xf32> to vector<16x128xf32>
    %467 = arith.mulf %466, %14 : vector<16x128xf32>
    %468 = arith.addf %465, %467 : vector<16x128xf32>
    %c11_150 = arith.constant 11 : index
    %c0_151 = arith.constant 0 : index
    %c0_152 = arith.constant 0 : index
    %469 = vector.load %arg1[%c11_150, %c0_151, %c0_152] : memref<18x18x128xf32, #tpu.memory_space<vmem>>, vector<1x18x128xf32>
    %470 = vector.shape_cast %469 : vector<1x18x128xf32> to vector<18x128xf32>
    %471 = vector.extract_strided_slice %470 {offsets = [0, 0], sizes = [16, 128], strides = [1, 1]} : vector<18x128xf32> to vector<16x128xf32>
    %472 = arith.mulf %471, %19 : vector<16x128xf32>
    %473 = arith.addf %468, %472 : vector<16x128xf32>
    %474 = vector.extract_strided_slice %470 {offsets = [1, 0], sizes = [16, 128], strides = [1, 1]} : vector<18x128xf32> to vector<16x128xf32>
    %475 = arith.mulf %474, %24 : vector<16x128xf32>
    %476 = arith.addf %473, %475 : vector<16x128xf32>
    %477 = vector.extract_strided_slice %470 {offsets = [2, 0], sizes = [16, 128], strides = [1, 1]} : vector<18x128xf32> to vector<16x128xf32>
    %478 = arith.mulf %477, %29 : vector<16x128xf32>
    %479 = arith.addf %476, %478 : vector<16x128xf32>
    %c12 = arith.constant 12 : index
    %c0_153 = arith.constant 0 : index
    %c0_154 = arith.constant 0 : index
    %480 = vector.load %arg1[%c12, %c0_153, %c0_154] : memref<18x18x128xf32, #tpu.memory_space<vmem>>, vector<1x18x128xf32>
    %481 = vector.shape_cast %480 : vector<1x18x128xf32> to vector<18x128xf32>
    %482 = vector.extract_strided_slice %481 {offsets = [0, 0], sizes = [16, 128], strides = [1, 1]} : vector<18x128xf32> to vector<16x128xf32>
    %483 = arith.mulf %482, %34 : vector<16x128xf32>
    %484 = arith.addf %479, %483 : vector<16x128xf32>
    %485 = vector.extract_strided_slice %481 {offsets = [1, 0], sizes = [16, 128], strides = [1, 1]} : vector<18x128xf32> to vector<16x128xf32>
    %486 = arith.mulf %485, %39 : vector<16x128xf32>
    %487 = arith.addf %484, %486 : vector<16x128xf32>
    %488 = vector.extract_strided_slice %481 {offsets = [2, 0], sizes = [16, 128], strides = [1, 1]} : vector<18x128xf32> to vector<16x128xf32>
    %489 = arith.mulf %488, %44 : vector<16x128xf32>
    %490 = arith.addf %487, %489 : vector<16x128xf32>
    %cst_155 = arith.constant 0.000000e+00 : f32
    %491 = vector.broadcast %cst_155 : f32 to vector<16x128xf32>
    %492 = arith.cmpf oge, %490, %491 : vector<16x128xf32>
    %cst_156 = arith.constant 1.000000e-01 : f32
    %493 = vector.broadcast %cst_156 : f32 to vector<16x128xf32>
    %494 = arith.mulf %493, %490 : vector<16x128xf32>
    %495 = arith.select %492, %490, %494 : vector<16x128xi1>, vector<16x128xf32>
    %c10_157 = arith.constant 10 : index
    %c0_158 = arith.constant 0 : index
    %c0_159 = arith.constant 0 : index
    %496 = vector.load %arg4[%c10_157, %c0_158, %c0_159] : memref<16x16x128xf32, #tpu.memory_space<vmem>>, vector<1x16x128xf32>
    %497 = vector.shape_cast %496 : vector<1x16x128xf32> to vector<16x128xf32>
    %498 = vector.shape_cast %495 : vector<16x128xf32> to vector<1x16x128xf32>
    tpu.vector_store %arg4[%c10_157, %c0_158, %c0_159], %498 {strides = array<i32>} : memref<16x16x128xf32, #tpu.memory_space<vmem>>, vector<1x16x128xf32>,
    %c11_160 = arith.constant 11 : index
    %c0_161 = arith.constant 0 : index
    %c0_162 = arith.constant 0 : index
    %499 = vector.load %arg1[%c11_160, %c0_161, %c0_162] : memref<18x18x128xf32, #tpu.memory_space<vmem>>, vector<1x18x128xf32>
    %500 = vector.shape_cast %499 : vector<1x18x128xf32> to vector<18x128xf32>
    %501 = vector.extract_strided_slice %500 {offsets = [0, 0], sizes = [16, 128], strides = [1, 1]} : vector<18x128xf32> to vector<16x128xf32>
    %502 = arith.mulf %501, %4 : vector<16x128xf32>
    %503 = arith.addf %47, %502 : vector<16x128xf32>
    %504 = vector.extract_strided_slice %500 {offsets = [1, 0], sizes = [16, 128], strides = [1, 1]} : vector<18x128xf32> to vector<16x128xf32>
    %505 = arith.mulf %504, %9 : vector<16x128xf32>
    %506 = arith.addf %503, %505 : vector<16x128xf32>
    %507 = vector.extract_strided_slice %500 {offsets = [2, 0], sizes = [16, 128], strides = [1, 1]} : vector<18x128xf32> to vector<16x128xf32>
    %508 = arith.mulf %507, %14 : vector<16x128xf32>
    %509 = arith.addf %506, %508 : vector<16x128xf32>
    %c12_163 = arith.constant 12 : index
    %c0_164 = arith.constant 0 : index
    %c0_165 = arith.constant 0 : index
    %510 = vector.load %arg1[%c12_163, %c0_164, %c0_165] : memref<18x18x128xf32, #tpu.memory_space<vmem>>, vector<1x18x128xf32>
    %511 = vector.shape_cast %510 : vector<1x18x128xf32> to vector<18x128xf32>
    %512 = vector.extract_strided_slice %511 {offsets = [0, 0], sizes = [16, 128], strides = [1, 1]} : vector<18x128xf32> to vector<16x128xf32>
    %513 = arith.mulf %512, %19 : vector<16x128xf32>
    %514 = arith.addf %509, %513 : vector<16x128xf32>
    %515 = vector.extract_strided_slice %511 {offsets = [1, 0], sizes = [16, 128], strides = [1, 1]} : vector<18x128xf32> to vector<16x128xf32>
    %516 = arith.mulf %515, %24 : vector<16x128xf32>
    %517 = arith.addf %514, %516 : vector<16x128xf32>
    %518 = vector.extract_strided_slice %511 {offsets = [2, 0], sizes = [16, 128], strides = [1, 1]} : vector<18x128xf32> to vector<16x128xf32>
    %519 = arith.mulf %518, %29 : vector<16x128xf32>
    %520 = arith.addf %517, %519 : vector<16x128xf32>
    %c13 = arith.constant 13 : index
    %c0_166 = arith.constant 0 : index
    %c0_167 = arith.constant 0 : index
    %521 = vector.load %arg1[%c13, %c0_166, %c0_167] : memref<18x18x128xf32, #tpu.memory_space<vmem>>, vector<1x18x128xf32>
    %522 = vector.shape_cast %521 : vector<1x18x128xf32> to vector<18x128xf32>
    %523 = vector.extract_strided_slice %522 {offsets = [0, 0], sizes = [16, 128], strides = [1, 1]} : vector<18x128xf32> to vector<16x128xf32>
    %524 = arith.mulf %523, %34 : vector<16x128xf32>
    %525 = arith.addf %520, %524 : vector<16x128xf32>
    %526 = vector.extract_strided_slice %522 {offsets = [1, 0], sizes = [16, 128], strides = [1, 1]} : vector<18x128xf32> to vector<16x128xf32>
    %527 = arith.mulf %526, %39 : vector<16x128xf32>
    %528 = arith.addf %525, %527 : vector<16x128xf32>
    %529 = vector.extract_strided_slice %522 {offsets = [2, 0], sizes = [16, 128], strides = [1, 1]} : vector<18x128xf32> to vector<16x128xf32>
    %530 = arith.mulf %529, %44 : vector<16x128xf32>
    %531 = arith.addf %528, %530 : vector<16x128xf32>
    %cst_168 = arith.constant 0.000000e+00 : f32
    %532 = vector.broadcast %cst_168 : f32 to vector<16x128xf32>
    %533 = arith.cmpf oge, %531, %532 : vector<16x128xf32>
    %cst_169 = arith.constant 1.000000e-01 : f32
    %534 = vector.broadcast %cst_169 : f32 to vector<16x128xf32>
    %535 = arith.mulf %534, %531 : vector<16x128xf32>
    %536 = arith.select %533, %531, %535 : vector<16x128xi1>, vector<16x128xf32>
    %c11_170 = arith.constant 11 : index
    %c0_171 = arith.constant 0 : index
    %c0_172 = arith.constant 0 : index
    %537 = vector.load %arg4[%c11_170, %c0_171, %c0_172] : memref<16x16x128xf32, #tpu.memory_space<vmem>>, vector<1x16x128xf32>
    %538 = vector.shape_cast %537 : vector<1x16x128xf32> to vector<16x128xf32>
    %539 = vector.shape_cast %536 : vector<16x128xf32> to vector<1x16x128xf32>
    tpu.vector_store %arg4[%c11_170, %c0_171, %c0_172], %539 {strides = array<i32>} : memref<16x16x128xf32, #tpu.memory_space<vmem>>, vector<1x16x128xf32>,
    %c12_173 = arith.constant 12 : index
    %c0_174 = arith.constant 0 : index
    %c0_175 = arith.constant 0 : index
    %540 = vector.load %arg1[%c12_173, %c0_174, %c0_175] : memref<18x18x128xf32, #tpu.memory_space<vmem>>, vector<1x18x128xf32>
    %541 = vector.shape_cast %540 : vector<1x18x128xf32> to vector<18x128xf32>
    %542 = vector.extract_strided_slice %541 {offsets = [0, 0], sizes = [16, 128], strides = [1, 1]} : vector<18x128xf32> to vector<16x128xf32>
    %543 = arith.mulf %542, %4 : vector<16x128xf32>
    %544 = arith.addf %47, %543 : vector<16x128xf32>
    %545 = vector.extract_strided_slice %541 {offsets = [1, 0], sizes = [16, 128], strides = [1, 1]} : vector<18x128xf32> to vector<16x128xf32>
    %546 = arith.mulf %545, %9 : vector<16x128xf32>
    %547 = arith.addf %544, %546 : vector<16x128xf32>
    %548 = vector.extract_strided_slice %541 {offsets = [2, 0], sizes = [16, 128], strides = [1, 1]} : vector<18x128xf32> to vector<16x128xf32>
    %549 = arith.mulf %548, %14 : vector<16x128xf32>
    %550 = arith.addf %547, %549 : vector<16x128xf32>
    %c13_176 = arith.constant 13 : index
    %c0_177 = arith.constant 0 : index
    %c0_178 = arith.constant 0 : index
    %551 = vector.load %arg1[%c13_176, %c0_177, %c0_178] : memref<18x18x128xf32, #tpu.memory_space<vmem>>, vector<1x18x128xf32>
    %552 = vector.shape_cast %551 : vector<1x18x128xf32> to vector<18x128xf32>
    %553 = vector.extract_strided_slice %552 {offsets = [0, 0], sizes = [16, 128], strides = [1, 1]} : vector<18x128xf32> to vector<16x128xf32>
    %554 = arith.mulf %553, %19 : vector<16x128xf32>
    %555 = arith.addf %550, %554 : vector<16x128xf32>
    %556 = vector.extract_strided_slice %552 {offsets = [1, 0], sizes = [16, 128], strides = [1, 1]} : vector<18x128xf32> to vector<16x128xf32>
    %557 = arith.mulf %556, %24 : vector<16x128xf32>
    %558 = arith.addf %555, %557 : vector<16x128xf32>
    %559 = vector.extract_strided_slice %552 {offsets = [2, 0], sizes = [16, 128], strides = [1, 1]} : vector<18x128xf32> to vector<16x128xf32>
    %560 = arith.mulf %559, %29 : vector<16x128xf32>
    %561 = arith.addf %558, %560 : vector<16x128xf32>
    %c14 = arith.constant 14 : index
    %c0_179 = arith.constant 0 : index
    %c0_180 = arith.constant 0 : index
    %562 = vector.load %arg1[%c14, %c0_179, %c0_180] : memref<18x18x128xf32, #tpu.memory_space<vmem>>, vector<1x18x128xf32>
    %563 = vector.shape_cast %562 : vector<1x18x128xf32> to vector<18x128xf32>
    %564 = vector.extract_strided_slice %563 {offsets = [0, 0], sizes = [16, 128], strides = [1, 1]} : vector<18x128xf32> to vector<16x128xf32>
    %565 = arith.mulf %564, %34 : vector<16x128xf32>
    %566 = arith.addf %561, %565 : vector<16x128xf32>
    %567 = vector.extract_strided_slice %563 {offsets = [1, 0], sizes = [16, 128], strides = [1, 1]} : vector<18x128xf32> to vector<16x128xf32>
    %568 = arith.mulf %567, %39 : vector<16x128xf32>
    %569 = arith.addf %566, %568 : vector<16x128xf32>
    %570 = vector.extract_strided_slice %563 {offsets = [2, 0], sizes = [16, 128], strides = [1, 1]} : vector<18x128xf32> to vector<16x128xf32>
    %571 = arith.mulf %570, %44 : vector<16x128xf32>
    %572 = arith.addf %569, %571 : vector<16x128xf32>
    %cst_181 = arith.constant 0.000000e+00 : f32
    %573 = vector.broadcast %cst_181 : f32 to vector<16x128xf32>
    %574 = arith.cmpf oge, %572, %573 : vector<16x128xf32>
    %cst_182 = arith.constant 1.000000e-01 : f32
    %575 = vector.broadcast %cst_182 : f32 to vector<16x128xf32>
    %576 = arith.mulf %575, %572 : vector<16x128xf32>
    %577 = arith.select %574, %572, %576 : vector<16x128xi1>, vector<16x128xf32>
    %c12_183 = arith.constant 12 : index
    %c0_184 = arith.constant 0 : index
    %c0_185 = arith.constant 0 : index
    %578 = vector.load %arg4[%c12_183, %c0_184, %c0_185] : memref<16x16x128xf32, #tpu.memory_space<vmem>>, vector<1x16x128xf32>
    %579 = vector.shape_cast %578 : vector<1x16x128xf32> to vector<16x128xf32>
    %580 = vector.shape_cast %577 : vector<16x128xf32> to vector<1x16x128xf32>
    tpu.vector_store %arg4[%c12_183, %c0_184, %c0_185], %580 {strides = array<i32>} : memref<16x16x128xf32, #tpu.memory_space<vmem>>, vector<1x16x128xf32>,
    %c13_186 = arith.constant 13 : index
    %c0_187 = arith.constant 0 : index
    %c0_188 = arith.constant 0 : index
    %581 = vector.load %arg1[%c13_186, %c0_187, %c0_188] : memref<18x18x128xf32, #tpu.memory_space<vmem>>, vector<1x18x128xf32>
    %582 = vector.shape_cast %581 : vector<1x18x128xf32> to vector<18x128xf32>
    %583 = vector.extract_strided_slice %582 {offsets = [0, 0], sizes = [16, 128], strides = [1, 1]} : vector<18x128xf32> to vector<16x128xf32>
    %584 = arith.mulf %583, %4 : vector<16x128xf32>
    %585 = arith.addf %47, %584 : vector<16x128xf32>
    %586 = vector.extract_strided_slice %582 {offsets = [1, 0], sizes = [16, 128], strides = [1, 1]} : vector<18x128xf32> to vector<16x128xf32>
    %587 = arith.mulf %586, %9 : vector<16x128xf32>
    %588 = arith.addf %585, %587 : vector<16x128xf32>
    %589 = vector.extract_strided_slice %582 {offsets = [2, 0], sizes = [16, 128], strides = [1, 1]} : vector<18x128xf32> to vector<16x128xf32>
    %590 = arith.mulf %589, %14 : vector<16x128xf32>
    %591 = arith.addf %588, %590 : vector<16x128xf32>
    %c14_189 = arith.constant 14 : index
    %c0_190 = arith.constant 0 : index
    %c0_191 = arith.constant 0 : index
    %592 = vector.load %arg1[%c14_189, %c0_190, %c0_191] : memref<18x18x128xf32, #tpu.memory_space<vmem>>, vector<1x18x128xf32>
    %593 = vector.shape_cast %592 : vector<1x18x128xf32> to vector<18x128xf32>
    %594 = vector.extract_strided_slice %593 {offsets = [0, 0], sizes = [16, 128], strides = [1, 1]} : vector<18x128xf32> to vector<16x128xf32>
    %595 = arith.mulf %594, %19 : vector<16x128xf32>
    %596 = arith.addf %591, %595 : vector<16x128xf32>
    %597 = vector.extract_strided_slice %593 {offsets = [1, 0], sizes = [16, 128], strides = [1, 1]} : vector<18x128xf32> to vector<16x128xf32>
    %598 = arith.mulf %597, %24 : vector<16x128xf32>
    %599 = arith.addf %596, %598 : vector<16x128xf32>
    %600 = vector.extract_strided_slice %593 {offsets = [2, 0], sizes = [16, 128], strides = [1, 1]} : vector<18x128xf32> to vector<16x128xf32>
    %601 = arith.mulf %600, %29 : vector<16x128xf32>
    %602 = arith.addf %599, %601 : vector<16x128xf32>
    %c15 = arith.constant 15 : index
    %c0_192 = arith.constant 0 : index
    %c0_193 = arith.constant 0 : index
    %603 = vector.load %arg1[%c15, %c0_192, %c0_193] : memref<18x18x128xf32, #tpu.memory_space<vmem>>, vector<1x18x128xf32>
    %604 = vector.shape_cast %603 : vector<1x18x128xf32> to vector<18x128xf32>
    %605 = vector.extract_strided_slice %604 {offsets = [0, 0], sizes = [16, 128], strides = [1, 1]} : vector<18x128xf32> to vector<16x128xf32>
    %606 = arith.mulf %605, %34 : vector<16x128xf32>
    %607 = arith.addf %602, %606 : vector<16x128xf32>
    %608 = vector.extract_strided_slice %604 {offsets = [1, 0], sizes = [16, 128], strides = [1, 1]} : vector<18x128xf32> to vector<16x128xf32>
    %609 = arith.mulf %608, %39 : vector<16x128xf32>
    %610 = arith.addf %607, %609 : vector<16x128xf32>
    %611 = vector.extract_strided_slice %604 {offsets = [2, 0], sizes = [16, 128], strides = [1, 1]} : vector<18x128xf32> to vector<16x128xf32>
    %612 = arith.mulf %611, %44 : vector<16x128xf32>
    %613 = arith.addf %610, %612 : vector<16x128xf32>
    %cst_194 = arith.constant 0.000000e+00 : f32
    %614 = vector.broadcast %cst_194 : f32 to vector<16x128xf32>
    %615 = arith.cmpf oge, %613, %614 : vector<16x128xf32>
    %cst_195 = arith.constant 1.000000e-01 : f32
    %616 = vector.broadcast %cst_195 : f32 to vector<16x128xf32>
    %617 = arith.mulf %616, %613 : vector<16x128xf32>
    %618 = arith.select %615, %613, %617 : vector<16x128xi1>, vector<16x128xf32>
    %c13_196 = arith.constant 13 : index
    %c0_197 = arith.constant 0 : index
    %c0_198 = arith.constant 0 : index
    %619 = vector.load %arg4[%c13_196, %c0_197, %c0_198] : memref<16x16x128xf32, #tpu.memory_space<vmem>>, vector<1x16x128xf32>
    %620 = vector.shape_cast %619 : vector<1x16x128xf32> to vector<16x128xf32>
    %621 = vector.shape_cast %618 : vector<16x128xf32> to vector<1x16x128xf32>
    tpu.vector_store %arg4[%c13_196, %c0_197, %c0_198], %621 {strides = array<i32>} : memref<16x16x128xf32, #tpu.memory_space<vmem>>, vector<1x16x128xf32>,
    %c14_199 = arith.constant 14 : index
    %c0_200 = arith.constant 0 : index
    %c0_201 = arith.constant 0 : index
    %622 = vector.load %arg1[%c14_199, %c0_200, %c0_201] : memref<18x18x128xf32, #tpu.memory_space<vmem>>, vector<1x18x128xf32>
    %623 = vector.shape_cast %622 : vector<1x18x128xf32> to vector<18x128xf32>
    %624 = vector.extract_strided_slice %623 {offsets = [0, 0], sizes = [16, 128], strides = [1, 1]} : vector<18x128xf32> to vector<16x128xf32>
    %625 = arith.mulf %624, %4 : vector<16x128xf32>
    %626 = arith.addf %47, %625 : vector<16x128xf32>
    %627 = vector.extract_strided_slice %623 {offsets = [1, 0], sizes = [16, 128], strides = [1, 1]} : vector<18x128xf32> to vector<16x128xf32>
    %628 = arith.mulf %627, %9 : vector<16x128xf32>
    %629 = arith.addf %626, %628 : vector<16x128xf32>
    %630 = vector.extract_strided_slice %623 {offsets = [2, 0], sizes = [16, 128], strides = [1, 1]} : vector<18x128xf32> to vector<16x128xf32>
    %631 = arith.mulf %630, %14 : vector<16x128xf32>
    %632 = arith.addf %629, %631 : vector<16x128xf32>
    %c15_202 = arith.constant 15 : index
    %c0_203 = arith.constant 0 : index
    %c0_204 = arith.constant 0 : index
    %633 = vector.load %arg1[%c15_202, %c0_203, %c0_204] : memref<18x18x128xf32, #tpu.memory_space<vmem>>, vector<1x18x128xf32>
    %634 = vector.shape_cast %633 : vector<1x18x128xf32> to vector<18x128xf32>
    %635 = vector.extract_strided_slice %634 {offsets = [0, 0], sizes = [16, 128], strides = [1, 1]} : vector<18x128xf32> to vector<16x128xf32>
    %636 = arith.mulf %635, %19 : vector<16x128xf32>
    %637 = arith.addf %632, %636 : vector<16x128xf32>
    %638 = vector.extract_strided_slice %634 {offsets = [1, 0], sizes = [16, 128], strides = [1, 1]} : vector<18x128xf32> to vector<16x128xf32>
    %639 = arith.mulf %638, %24 : vector<16x128xf32>
    %640 = arith.addf %637, %639 : vector<16x128xf32>
    %641 = vector.extract_strided_slice %634 {offsets = [2, 0], sizes = [16, 128], strides = [1, 1]} : vector<18x128xf32> to vector<16x128xf32>
    %642 = arith.mulf %641, %29 : vector<16x128xf32>
    %643 = arith.addf %640, %642 : vector<16x128xf32>
    %c16 = arith.constant 16 : index
    %c0_205 = arith.constant 0 : index
    %c0_206 = arith.constant 0 : index
    %644 = vector.load %arg1[%c16, %c0_205, %c0_206] : memref<18x18x128xf32, #tpu.memory_space<vmem>>, vector<1x18x128xf32>
    %645 = vector.shape_cast %644 : vector<1x18x128xf32> to vector<18x128xf32>
    %646 = vector.extract_strided_slice %645 {offsets = [0, 0], sizes = [16, 128], strides = [1, 1]} : vector<18x128xf32> to vector<16x128xf32>
    %647 = arith.mulf %646, %34 : vector<16x128xf32>
    %648 = arith.addf %643, %647 : vector<16x128xf32>
    %649 = vector.extract_strided_slice %645 {offsets = [1, 0], sizes = [16, 128], strides = [1, 1]} : vector<18x128xf32> to vector<16x128xf32>
    %650 = arith.mulf %649, %39 : vector<16x128xf32>
    %651 = arith.addf %648, %650 : vector<16x128xf32>
    %652 = vector.extract_strided_slice %645 {offsets = [2, 0], sizes = [16, 128], strides = [1, 1]} : vector<18x128xf32> to vector<16x128xf32>
    %653 = arith.mulf %652, %44 : vector<16x128xf32>
    %654 = arith.addf %651, %653 : vector<16x128xf32>
    %cst_207 = arith.constant 0.000000e+00 : f32
    %655 = vector.broadcast %cst_207 : f32 to vector<16x128xf32>
    %656 = arith.cmpf oge, %654, %655 : vector<16x128xf32>
    %cst_208 = arith.constant 1.000000e-01 : f32
    %657 = vector.broadcast %cst_208 : f32 to vector<16x128xf32>
    %658 = arith.mulf %657, %654 : vector<16x128xf32>
    %659 = arith.select %656, %654, %658 : vector<16x128xi1>, vector<16x128xf32>
    %c14_209 = arith.constant 14 : index
    %c0_210 = arith.constant 0 : index
    %c0_211 = arith.constant 0 : index
    %660 = vector.load %arg4[%c14_209, %c0_210, %c0_211] : memref<16x16x128xf32, #tpu.memory_space<vmem>>, vector<1x16x128xf32>
    %661 = vector.shape_cast %660 : vector<1x16x128xf32> to vector<16x128xf32>
    %662 = vector.shape_cast %659 : vector<16x128xf32> to vector<1x16x128xf32>
    tpu.vector_store %arg4[%c14_209, %c0_210, %c0_211], %662 {strides = array<i32>} : memref<16x16x128xf32, #tpu.memory_space<vmem>>, vector<1x16x128xf32>,
    %c15_212 = arith.constant 15 : index
    %c0_213 = arith.constant 0 : index
    %c0_214 = arith.constant 0 : index
    %663 = vector.load %arg1[%c15_212, %c0_213, %c0_214] : memref<18x18x128xf32, #tpu.memory_space<vmem>>, vector<1x18x128xf32>
    %664 = vector.shape_cast %663 : vector<1x18x128xf32> to vector<18x128xf32>
    %665 = vector.extract_strided_slice %664 {offsets = [0, 0], sizes = [16, 128], strides = [1, 1]} : vector<18x128xf32> to vector<16x128xf32>
    %666 = arith.mulf %665, %4 : vector<16x128xf32>
    %667 = arith.addf %47, %666 : vector<16x128xf32>
    %668 = vector.extract_strided_slice %664 {offsets = [1, 0], sizes = [16, 128], strides = [1, 1]} : vector<18x128xf32> to vector<16x128xf32>
    %669 = arith.mulf %668, %9 : vector<16x128xf32>
    %670 = arith.addf %667, %669 : vector<16x128xf32>
    %671 = vector.extract_strided_slice %664 {offsets = [2, 0], sizes = [16, 128], strides = [1, 1]} : vector<18x128xf32> to vector<16x128xf32>
    %672 = arith.mulf %671, %14 : vector<16x128xf32>
    %673 = arith.addf %670, %672 : vector<16x128xf32>
    %c16_215 = arith.constant 16 : index
    %c0_216 = arith.constant 0 : index
    %c0_217 = arith.constant 0 : index
    %674 = vector.load %arg1[%c16_215, %c0_216, %c0_217] : memref<18x18x128xf32, #tpu.memory_space<vmem>>, vector<1x18x128xf32>
    %675 = vector.shape_cast %674 : vector<1x18x128xf32> to vector<18x128xf32>
    %676 = vector.extract_strided_slice %675 {offsets = [0, 0], sizes = [16, 128], strides = [1, 1]} : vector<18x128xf32> to vector<16x128xf32>
    %677 = arith.mulf %676, %19 : vector<16x128xf32>
    %678 = arith.addf %673, %677 : vector<16x128xf32>
    %679 = vector.extract_strided_slice %675 {offsets = [1, 0], sizes = [16, 128], strides = [1, 1]} : vector<18x128xf32> to vector<16x128xf32>
    %680 = arith.mulf %679, %24 : vector<16x128xf32>
    %681 = arith.addf %678, %680 : vector<16x128xf32>
    %682 = vector.extract_strided_slice %675 {offsets = [2, 0], sizes = [16, 128], strides = [1, 1]} : vector<18x128xf32> to vector<16x128xf32>
    %683 = arith.mulf %682, %29 : vector<16x128xf32>
    %684 = arith.addf %681, %683 : vector<16x128xf32>
    %c17 = arith.constant 17 : index
    %c0_218 = arith.constant 0 : index
    %c0_219 = arith.constant 0 : index
    %685 = vector.load %arg1[%c17, %c0_218, %c0_219] : memref<18x18x128xf32, #tpu.memory_space<vmem>>, vector<1x18x128xf32>
    %686 = vector.shape_cast %685 : vector<1x18x128xf32> to vector<18x128xf32>
    %687 = vector.extract_strided_slice %686 {offsets = [0, 0], sizes = [16, 128], strides = [1, 1]} : vector<18x128xf32> to vector<16x128xf32>
    %688 = arith.mulf %687, %34 : vector<16x128xf32>
    %689 = arith.addf %684, %688 : vector<16x128xf32>
    %690 = vector.extract_strided_slice %686 {offsets = [1, 0], sizes = [16, 128], strides = [1, 1]} : vector<18x128xf32> to vector<16x128xf32>
    %691 = arith.mulf %690, %39 : vector<16x128xf32>
    %692 = arith.addf %689, %691 : vector<16x128xf32>
    %693 = vector.extract_strided_slice %686 {offsets = [2, 0], sizes = [16, 128], strides = [1, 1]} : vector<18x128xf32> to vector<16x128xf32>
    %694 = arith.mulf %693, %44 : vector<16x128xf32>
    %695 = arith.addf %692, %694 : vector<16x128xf32>
    %cst_220 = arith.constant 0.000000e+00 : f32
    %696 = vector.broadcast %cst_220 : f32 to vector<16x128xf32>
    %697 = arith.cmpf oge, %695, %696 : vector<16x128xf32>
    %cst_221 = arith.constant 1.000000e-01 : f32
    %698 = vector.broadcast %cst_221 : f32 to vector<16x128xf32>
    %699 = arith.mulf %698, %695 : vector<16x128xf32>
    %700 = arith.select %697, %695, %699 : vector<16x128xi1>, vector<16x128xf32>
    %c15_222 = arith.constant 15 : index
    %c0_223 = arith.constant 0 : index
    %c0_224 = arith.constant 0 : index
    %701 = vector.load %arg4[%c15_222, %c0_223, %c0_224] : memref<16x16x128xf32, #tpu.memory_space<vmem>>, vector<1x16x128xf32>
    %702 = vector.shape_cast %701 : vector<1x16x128xf32> to vector<16x128xf32>
    %703 = vector.shape_cast %700 : vector<16x128xf32> to vector<1x16x128xf32>
    tpu.vector_store %arg4[%c15_222, %c0_223, %c0_224], %703 {strides = array<i32>} : memref<16x16x128xf32, #tpu.memory_space<vmem>>, vector<1x16x128xf32>,
    return
  }
  func.func @transform_0(%arg0: i32) -> (i32, i32, i32) {
    %c0_i32 = arith.constant 0 : i32
    %c0_i32_0 = arith.constant 0 : i32
    %c0_i32_1 = arith.constant 0 : i32
    return %arg0, %c0_i32, %c0_i32_0 : i32, i32, i32
  }
  func.func @transform_1(%arg0: i32) -> (i32, i32) {
    %c0_i32 = arith.constant 0 : i32
    %c0_i32_0 = arith.constant 0 : i32
    %c0_i32_1 = arith.constant 0 : i32
    return %c0_i32, %c0_i32_0 : i32, i32
  }
  func.func @transform_2(%arg0: i32) -> (i32, i32) {
    %c0_i32 = arith.constant 0 : i32
    %c0_i32_0 = arith.constant 0 : i32
    %c0_i32_1 = arith.constant 0 : i32
    return %c0_i32, %c0_i32_0 : i32, i32
  }
  func.func @transform_3(%arg0: i32) -> (i32, i32, i32) {
    %c0_i32 = arith.constant 0 : i32
    %c0_i32_0 = arith.constant 0 : i32
    %c0_i32_1 = arith.constant 0 : i32
    return %arg0, %c0_i32, %c0_i32_0 : i32, i32, i32
  }
}

</mosaic_0001>

<llo_original>
// kernel: tpu_custom_call.1
$region0: #{tpu_custom_call.1}
  #allocation0 [shape = 'u32[]', space=smem, size = 0x4, offset = 0x4, fixed_abs, tag = 'smem constant byte address 0x4 - core index']
  #allocation1 [shape = 'u32[144,128]{1,0:T(1,128)}', space=vmem, size = 0x12000, scoped, tag = 'internal scratch']
  %s0 = inlined_call_operand.vmem [shape: f32[36,18,128], index: 0, kind: input, shape index: {}]
  %s1 = inlined_call_operand.vmem [shape: f32[9,128], index: 1, kind: input, shape index: {}]
  %s2 = inlined_call_operand.vmem [shape: f32[1,128], index: 2, kind: input, shape index: {}]
  %s3 = inlined_call_operand.hbm [shape: f32[32,16,128], index: 3, kind: output, shape index: {}]
  %s4 = sld [smem:[#allocation0]]
  $region45: #{tpu_custom_call.1} parent=0
    _
  %s6 = ssub.s32 1, %s4
  %s7 = scalar_select 0, %s6, %s4
  $region1: #{tpu_custom_call.1} parent=0
    #allocation2 [shape = 'u8[262144]{0}', space=vmem, size = 0x40000, scoped, tag = 'output window, operand 0']
    #allocation3 [shape = 's32[2]{0}', space=sflag, size = 0x8, scoped, tag = 'scoped memory for tpu_custom_call.1']
    %8 = vsyncpa [#allocation3], 0
    %s9 = scalar_lea.sflag [#allocation3], 1
    %10 = vsyncpa %s9, 0
    loop: start=0, step=1, limit=4
    $region2: #{tpu_custom_call.1} parent=1 // loop_pre_header
      _
    $region3: #{tpu_custom_call.1} parent=1 // loop_header
      %s12 = sphi 0, %s16
      %p13 = scmp.ge.s32.totalorder %s12, 4
      %s22 = sphi 0, %s24
      %s25 = sphi 0, %s22
      %s26 = sphi 0, %s25
      %s42 = sphi 0, %s26
      %s46 = sphi 0, %s46
      %s48 = sphi 0, %s46
      %s49 = sphi 0, %s48
      %s63 = sphi 0, %s49
      %s67 = sphi 0, %s67
      %s69 = sphi 0, %s67
      %s70 = sphi 0, %s69
      %s84 = sphi 0, %s70
      %s90 = sphi 0, %s92
      %s93 = sphi 0, %s90
      %s94 = sphi 0, %s93
      %s110 = sphi 0, %s94
    $region4: #{tpu_custom_call.1} parent=1 // loop_header_branch
      %15 = sbr.rel (%p13) target = $region8
    $region5: #{tpu_custom_call.1} parent=1 // loop_body
      %s17 = ssub.s32 %s12, 1
      %s18 = ssub.s32 %s12, 2
      %s19 = sadd.s32 %s12, 1
      %s20 = ssub.s32 %s12, %s19
      %p21 = scmp.eq.s32.totalorder %s20, 0
      %s23 = sadd.s32 %s22, 1
      %s24 = scalar_select %p21, %s22, %s23
      %p27 = pneg %p21
      %p28 = scmp.eq.s32.totalorder %s12, 1
      %p29 = por %p27, %p28
      %p30 = scmp.ne.s32.totalorder %s22, %s25
      %p31 = scmp.eq.s32.totalorder %s12, 0
      %p32 = por %p30, %p31
      %p33 = scmp.ne.s32.totalorder %s22, %s25
      %p34 = scmp.eq.s32.totalorder %s17, 1
      %p35 = por %p33, %p34
      %p36 = scmp.ne.s32.totalorder %s25, %s26
      %p37 = scmp.eq.s32.totalorder %s17, 0
      %p38 = por %p36, %p37
      %p39 = scmp.ne.s32.totalorder %s25, %s26
      %p40 = scmp.eq.s32.totalorder %s18, 1
      %p41 = por %p39, %p40
      %p43 = scmp.ne.s32.totalorder %s26, %s42
      %p44 = scmp.eq.s32.totalorder %s18, 0
      %p45 = por %p43, %p44
      %s47 = sadd.s32 %s46, 1
      %p50 = scmp.eq.s32.totalorder %s12, 1
      %p51 = scmp.ne.s32.totalorder %s46, %s48
      %p52 = scmp.eq.s32.totalorder %s12, 0
      %p53 = por %p51, %p52
      %p54 = scmp.ne.s32.totalorder %s46, %s48
      %p55 = scmp.eq.s32.totalorder %s17, 1
      %p56 = por %p54, %p55
      %p57 = scmp.ne.s32.totalorder %s48, %s49
      %p58 = scmp.eq.s32.totalorder %s17, 0
      %p59 = por %p57, %p58
      %p60 = scmp.ne.s32.totalorder %s48, %s49
      %p61 = scmp.eq.s32.totalorder %s18, 1
      %p62 = por %p60, %p61
      %p64 = scmp.ne.s32.totalorder %s49, %s63
      %p65 = scmp.eq.s32.totalorder %s18, 0
      %p66 = por %p64, %p65
      %s68 = sadd.s32 %s67, 1
      %p71 = scmp.eq.s32.totalorder %s12, 1
      %p72 = scmp.ne.s32.totalorder %s67, %s69
      %p73 = scmp.eq.s32.totalorder %s12, 0
      %p74 = por %p72, %p73
      %p75 = scmp.ne.s32.totalorder %s67, %s69
      %p76 = scmp.eq.s32.totalorder %s17, 1
      %p77 = por %p75, %p76
      %p78 = scmp.ne.s32.totalorder %s69, %s70
      %p79 = scmp.eq.s32.totalorder %s17, 0
      %p80 = por %p78, %p79
      %p81 = scmp.ne.s32.totalorder %s69, %s70
      %p82 = scmp.eq.s32.totalorder %s18, 1
      %p83 = por %p81, %p82
      %p85 = scmp.ne.s32.totalorder %s70, %s84
      %p86 = scmp.eq.s32.totalorder %s18, 0
      %p87 = por %p85, %p86
      %s88 = ssub.s32 %s12, %s19
      %p89 = scmp.eq.s32.totalorder %s88, 0
      %s91 = sadd.s32 %s90, 1
      %s92 = scalar_select %p89, %s90, %s91
      %p95 = pneg %p89
      %p96 = scmp.eq.s32.totalorder %s12, 1
      %p97 = por %p95, %p96
      %p98 = scmp.ne.s32.totalorder %s90, %s93
      %p99 = scmp.eq.s32.totalorder %s12, 0
      %p100 = por %p98, %p99
      %p101 = scmp.ne.s32.totalorder %s90, %s93
      %p102 = scmp.eq.s32.totalorder %s17, 1
      %p103 = por %p101, %p102
      %p104 = scmp.ne.s32.totalorder %s93, %s94
      %p105 = scmp.eq.s32.totalorder %s17, 0
      %p106 = por %p104, %p105
      %p107 = scmp.ne.s32.totalorder %s93, %s94
      %p108 = scmp.eq.s32.totalorder %s18, 1
      %p109 = por %p107, %p108
      %p111 = scmp.ne.s32.totalorder %s94, %s110
      %p112 = scmp.eq.s32.totalorder %s18, 0
      %p113 = por %p111, %p112
      %p114 = scmp.le.s32.totalorder 1, %s12
      %p115 = scmp.lt.s32.totalorder %s12, 3
      %p116 = pnand %p114, %p115
      %p117 = pneg %p116
      // Predicated region
      $region9: #{tpu_custom_call.1} parent=5 // pred_check
        _
      $region10: #{tpu_custom_call.1} parent=5 // pred_check_branch
        %119 = sbr.rel (%p116) target = $region12
      $region11: #{tpu_custom_call.1} parent=5 // pred_region
        %s120 = ssub.s32 %s12, 1
        // Predicated region
        $region13: #{tpu_custom_call.1} parent=11 // pred_check
          %p121 = pneg %p59
        $region14: #{tpu_custom_call.1} parent=11 // pred_check_branch
          %123 = sbr.rel (%p121) target = $region16
        $region15: #{tpu_custom_call.1} parent=11 // pred_region
          _
        $region16: #{tpu_custom_call.1} parent=11 // pred_fallthru
          _
        // Predicated region
        $region17: #{tpu_custom_call.1} parent=11 // pred_check
          %p124 = pneg %p80
        $region18: #{tpu_custom_call.1} parent=11 // pred_check_branch
          %126 = sbr.rel (%p124) target = $region20
        $region19: #{tpu_custom_call.1} parent=11 // pred_region
          _
        $region20: #{tpu_custom_call.1} parent=11 // pred_fallthru
          _
      $region12: #{tpu_custom_call.1} parent=5 // pred_fallthru
        _
      %p127 = scmp.lt.s32.totalorder %s12, 2
      // Predicated region
      $region21: #{tpu_custom_call.1} parent=5 // pred_check
        %p128 = pneg %p127
      $region22: #{tpu_custom_call.1} parent=5 // pred_check_branch
        %130 = sbr.rel (%p128) target = $region24
      $region23: #{tpu_custom_call.1} parent=5 // pred_region
        // Predicated region
        $region25: #{tpu_custom_call.1} parent=23 // pred_check
          %p131 = pneg %p32
        $region26: #{tpu_custom_call.1} parent=23 // pred_check_branch
          %133 = sbr.rel (%p131) target = $region28
        $region27: #{tpu_custom_call.1} parent=23 // pred_region
          %s134 = smul.u32 18, %s12
          %p135 = scmp.lt.s32.totalorder %s134, 35
          %s136 = scalar_select %p135, %s134, 35
          %s137 = smul.addr %s136, 3
          %s138 = smul.addr %s137, 8
          %s139 = scalar_lea.vmem %s0, %s138
          %s140 = smul.u32 18, %s12
        $region28: #{tpu_custom_call.1} parent=23 // pred_fallthru
          _
      $region24: #{tpu_custom_call.1} parent=5 // pred_fallthru
        _
      %p141 = scmp.le.s32.totalorder 1, %s12
      %p142 = scmp.lt.s32.totalorder %s12, 3
      %p143 = pnand %p141, %p142
      %p144 = pneg %p143
      // Predicated region
      $region29: #{tpu_custom_call.1} parent=5 // pred_check
        _
      $region30: #{tpu_custom_call.1} parent=5 // pred_check_branch
        %146 = sbr.rel (%p143) target = $region32
      $region31: #{tpu_custom_call.1} parent=5 // pred_region
        %s147 = ssub.s32 %s12, 1
        %s148 = smul.u32 18, %s17
        %p149 = scmp.lt.s32.totalorder %s148, 35
        %s150 = scalar_select %p149, %s148, 35
        %s151 = smul.addr %s150, 3
        %s152 = smul.addr %s151, 8
        %s153 = scalar_lea.vmem %s0, %s152
        %p154 = pneg %p38
        %p155 = pneg %p35
        %p156 = pneg %p59
        %p157 = pneg %p56
        %p158 = pneg %p80
        %p159 = pneg %p77
        %p160 = pneg %p106
        %p161 = pneg %p103
        %s162 = sand.u32 %s93, 1
        %s163 = scalar_lea.sflag [#allocation3], %s162
        %s164 = sand.u32 %s93, 1
        %s165 = smul.addr %s164, 256
        %s166 = scalar_lea.vmem [#allocation2], %s165
        %s167 = smul.u32 18, %s17
        %p168 = scmp.lt.s32.totalorder %s167, 35
        %s169 = scalar_select %p168, %s167, 35
        %s170 = smul.addr %s169, 3
        %s171 = smul.addr %s170, 8
        %s172 = scalar_lea.vmem %s0, %s171
        %s173 = smul.u32 18, %s17
        %s174 = smul.u32 16, %s17
        %v175 = vld [vmem:[%s1] sm:$0x1]
        %v176 = vlaneseq
        %v177 = vshrl.u32 %v176, 7
        %v178 = vsub.s32 0, %v177
        %v179 = vrot.slane %v175, %v178
        %v180 = vld [vmem:[%s1 + $0x1] sm:$0x1]
        %v181 = vlaneseq
        %v182 = vshrl.u32 %v181, 7
        %v183 = vsub.s32 0, %v182
        %v184 = vrot.slane %v180, %v183
        %v185 = vld [vmem:[%s1 + $0x2] sm:$0x1]
        %v186 = vlaneseq
        %v187 = vshrl.u32 %v186, 7
        %v188 = vsub.s32 0, %v187
        %v189 = vrot.slane %v185, %v188
        %v190 = vld [vmem:[%s1 + $0x3] sm:$0x1]
        %v191 = vlaneseq
        %v192 = vshrl.u32 %v191, 7
        %v193 = vsub.s32 0, %v192
        %v194 = vrot.slane %v190, %v193
        %v195 = vld [vmem:[%s1 + $0x4] sm:$0x1]
        %v196 = vlaneseq
        %v197 = vshrl.u32 %v196, 7
        %v198 = vsub.s32 0, %v197
        %v199 = vrot.slane %v195, %v198
        %v200 = vld [vmem:[%s1 + $0x5] sm:$0x1]
        %v201 = vlaneseq
        %v202 = vshrl.u32 %v201, 7
        %v203 = vsub.s32 0, %v202
        %v204 = vrot.slane %v200, %v203
        %v205 = vld [vmem:[%s1 + $0x6] sm:$0x1]
        %v206 = vlaneseq
        %v207 = vshrl.u32 %v206, 7
        %v208 = vsub.s32 0, %v207
        %v209 = vrot.slane %v205, %v208
        %v210 = vld [vmem:[%s1 + $0x7] sm:$0x1]
        %v211 = vlaneseq
        %v212 = vshrl.u32 %v211, 7
        %v213 = vsub.s32 0, %v212
        %v214 = vrot.slane %v210, %v213
        %v215 = vld [vmem:[%s1 + $0x8] sm:$0x1]
        %v216 = vlaneseq
        %v217 = vshrl.u32 %v216, 7
        %v218 = vsub.s32 0, %v217
        %v219 = vrot.slane %v215, %v218
        %v220 = vld [vmem:[%s2] sm:$0x1]
        %v222 = vlaneseq
        %v223 = vshrl.u32 %v222, 7
        %v224 = vsub.s32 0, %v223
        %v225 = vrot.slane %v220, %v224
        %v227 = vld [vmem:[%s172] sm:$0xff]
        %v228 = vld [vmem:[%s172 + $0x8] sm:$0xff]
        %v229 = vld [vmem:[%s172 + $0x10] sm:$0x3]
        %v230 = vmul.f32 %v227, %v179
        %v231 = vmul.f32 %v228, %v179
        %v232 = vadd.f32 %v225, %v230
        %v233 = vadd.f32 %v225, %v231
        %v234 = vmul.f32 %v227, %v184
        %v235 = vmul.f32 %v228, %v184
        %v236 = vmul.f32 %v229, %v184
        %vm240 = vcmask 1046528
        %v241 = vrot.slane %v234, 1
        %v242 = vrot.slane %v235, 1
        %v243 = vsel %vm240, %v241, %v242
        %v244 = vrot.slane %v236, 1
        %v245 = vsel %vm240, %v242, %v244
        %v248 = vadd.f32 %v232, %v243
        %v249 = vadd.f32 %v233, %v245
        %v250 = vmul.f32 %v227, %v189
        %v251 = vmul.f32 %v228, %v189
        %v252 = vmul.f32 %v229, %v189
        %vm256 = vcmask 1045504
        %v257 = vrot.slane %v250, 2
        %v258 = vrot.slane %v251, 2
        %v259 = vsel %vm256, %v257, %v258
        %v260 = vrot.slane %v252, 2
        %v261 = vsel %vm256, %v258, %v260
        %v264 = vadd.f32 %v248, %v259
        %v265 = vadd.f32 %v249, %v261
        %s266 = scalar_lea.vmem %s172, 24
        %v267 = vld [vmem:[%s266] sm:$0xff]
        %v268 = vld [vmem:[%s266 + $0x8] sm:$0xff]
        %v269 = vld [vmem:[%s266 + $0x10] sm:$0x3]
        %v270 = vmul.f32 %v267, %v194
        %v271 = vmul.f32 %v268, %v194
        %v272 = vadd.f32 %v264, %v270
        %v273 = vadd.f32 %v265, %v271
        %v274 = vmul.f32 %v267, %v199
        %v275 = vmul.f32 %v268, %v199
        %v276 = vmul.f32 %v269, %v199
        %v280 = vrot.slane %v274, 1
        %v281 = vrot.slane %v275, 1
        %v282 = vsel %vm240, %v280, %v281
        %v283 = vrot.slane %v276, 1
        %v284 = vsel %vm240, %v281, %v283
        %v287 = vadd.f32 %v272, %v282
        %v288 = vadd.f32 %v273, %v284
        %v289 = vmul.f32 %v267, %v204
        %v290 = vmul.f32 %v268, %v204
        %v291 = vmul.f32 %v269, %v204
        %v295 = vrot.slane %v289, 2
        %v296 = vrot.slane %v290, 2
        %v297 = vsel %vm256, %v295, %v296
        %v298 = vrot.slane %v291, 2
        %v299 = vsel %vm256, %v296, %v298
        %v302 = vadd.f32 %v287, %v297
        %v303 = vadd.f32 %v288, %v299
        %s304 = scalar_lea.vmem %s172, 48
        %v305 = vld [vmem:[%s304] sm:$0xff]
        %v306 = vld [vmem:[%s304 + $0x8] sm:$0xff]
        %v307 = vld [vmem:[%s304 + $0x10] sm:$0x3]
        %v308 = vmul.f32 %v305, %v209
        %v309 = vmul.f32 %v306, %v209
        %v310 = vadd.f32 %v302, %v308
        %v311 = vadd.f32 %v303, %v309
        %v312 = vmul.f32 %v305, %v214
        %v313 = vmul.f32 %v306, %v214
        %v314 = vmul.f32 %v307, %v214
        %v318 = vrot.slane %v312, 1
        %v319 = vrot.slane %v313, 1
        %v320 = vsel %vm240, %v318, %v319
        %v321 = vrot.slane %v314, 1
        %v322 = vsel %vm240, %v319, %v321
        %v325 = vadd.f32 %v310, %v320
        %v326 = vadd.f32 %v311, %v322
        %v327 = vmul.f32 %v305, %v219
        %v328 = vmul.f32 %v306, %v219
        %v329 = vmul.f32 %v307, %v219
        %v333 = vrot.slane %v327, 2
        %v334 = vrot.slane %v328, 2
        %v335 = vsel %vm256, %v333, %v334
        %v336 = vrot.slane %v329, 2
        %v337 = vsel %vm256, %v334, %v336
        %v340 = vadd.f32 %v325, %v335
        %v341 = vadd.f32 %v326, %v337
        %vm342 = vcmp.ge.f32.partialorder %v340, 0.0
        %vm343 = vcmp.ge.f32.partialorder %v341, 0.0
        %v344 = vmul.f32 %v340, 0.1
        %v345 = vmul.f32 %v341, 0.1
        %v346 = vsel %vm342, %v340, %v344
        %v347 = vsel %vm343, %v341, %v345
        %348 = vst [vmem:[%s166] sm:$0xff] %v346
        %349 = vst [vmem:[%s166 + $0x8] sm:$0xff] %v347
        %v350 = vld [vmem:[%s266] sm:$0xff]
        %v351 = vld [vmem:[%s266 + $0x8] sm:$0xff]
        %v352 = vld [vmem:[%s266 + $0x10] sm:$0x3]
        %v353 = vmul.f32 %v350, %v179
        %v354 = vmul.f32 %v351, %v179
        %v355 = vadd.f32 %v225, %v353
        %v356 = vadd.f32 %v225, %v354
        %v357 = vmul.f32 %v350, %v184
        %v358 = vmul.f32 %v351, %v184
        %v359 = vmul.f32 %v352, %v184
        %v363 = vrot.slane %v357, 1
        %v364 = vrot.slane %v358, 1
        %v365 = vsel %vm240, %v363, %v364
        %v366 = vrot.slane %v359, 1
        %v367 = vsel %vm240, %v364, %v366
        %v370 = vadd.f32 %v355, %v365
        %v371 = vadd.f32 %v356, %v367
        %v372 = vmul.f32 %v350, %v189
        %v373 = vmul.f32 %v351, %v189
        %v374 = vmul.f32 %v352, %v189
        %v378 = vrot.slane %v372, 2
        %v379 = vrot.slane %v373, 2
        %v380 = vsel %vm256, %v378, %v379
        %v381 = vrot.slane %v374, 2
        %v382 = vsel %vm256, %v379, %v381
        %v385 = vadd.f32 %v370, %v380
        %v386 = vadd.f32 %v371, %v382
        %v387 = vld [vmem:[%s304] sm:$0xff]
        %v388 = vld [vmem:[%s304 + $0x8] sm:$0xff]
        %v389 = vld [vmem:[%s304 + $0x10] sm:$0x3]
        %v390 = vmul.f32 %v387, %v194
        %v391 = vmul.f32 %v388, %v194
        %v392 = vadd.f32 %v385, %v390
        %v393 = vadd.f32 %v386, %v391
        %v394 = vmul.f32 %v387, %v199
        %v395 = vmul.f32 %v388, %v199
        %v396 = vmul.f32 %v389, %v199
        %v400 = vrot.slane %v394, 1
        %v401 = vrot.slane %v395, 1
        %v402 = vsel %vm240, %v400, %v401
        %v403 = vrot.slane %v396, 1
        %v404 = vsel %vm240, %v401, %v403
        %v407 = vadd.f32 %v392, %v402
        %v408 = vadd.f32 %v393, %v404
        %v409 = vmul.f32 %v387, %v204
        %v410 = vmul.f32 %v388, %v204
        %v411 = vmul.f32 %v389, %v204
        %v415 = vrot.slane %v409, 2
        %v416 = vrot.slane %v410, 2
        %v417 = vsel %vm256, %v415, %v416
        %v418 = vrot.slane %v411, 2
        %v419 = vsel %vm256, %v416, %v418
        %v422 = vadd.f32 %v407, %v417
        %v423 = vadd.f32 %v408, %v419
        %s424 = scalar_lea.vmem %s172, 72
        %v425 = vld [vmem:[%s424] sm:$0xff]
        %v426 = vld [vmem:[%s424 + $0x8] sm:$0xff]
        %v427 = vld [vmem:[%s424 + $0x10] sm:$0x3]
        %v428 = vmul.f32 %v425, %v209
        %v429 = vmul.f32 %v426, %v209
        %v430 = vadd.f32 %v422, %v428
        %v431 = vadd.f32 %v423, %v429
        %v432 = vmul.f32 %v425, %v214
        %v433 = vmul.f32 %v426, %v214
        %v434 = vmul.f32 %v427, %v214
        %v438 = vrot.slane %v432, 1
        %v439 = vrot.slane %v433, 1
        %v440 = vsel %vm240, %v438, %v439
        %v441 = vrot.slane %v434, 1
        %v442 = vsel %vm240, %v439, %v441
        %v445 = vadd.f32 %v430, %v440
        %v446 = vadd.f32 %v431, %v442
        %v447 = vmul.f32 %v425, %v219
        %v448 = vmul.f32 %v426, %v219
        %v449 = vmul.f32 %v427, %v219
        %v453 = vrot.slane %v447, 2
        %v454 = vrot.slane %v448, 2
        %v455 = vsel %vm256, %v453, %v454
        %v456 = vrot.slane %v449, 2
        %v457 = vsel %vm256, %v454, %v456
        %v460 = vadd.f32 %v445, %v455
        %v461 = vadd.f32 %v446, %v457
        %vm462 = vcmp.ge.f32.partialorder %v460, 0.0
        %vm463 = vcmp.ge.f32.partialorder %v461, 0.0
        %v464 = vmul.f32 %v460, 0.1
        %v465 = vmul.f32 %v461, 0.1
        %v466 = vsel %vm462, %v460, %v464
        %v467 = vsel %vm463, %v461, %v465
        %s468 = scalar_lea.vmem %s166, 16 [#allocation2]
        %469 = vst [vmem:[%s468] sm:$0xff] %v466
        %470 = vst [vmem:[%s468 + $0x8] sm:$0xff] %v467
        %v471 = vld [vmem:[%s304] sm:$0xff]
        %v472 = vld [vmem:[%s304 + $0x8] sm:$0xff]
        %v473 = vld [vmem:[%s304 + $0x10] sm:$0x3]
        %v474 = vmul.f32 %v471, %v179
        %v475 = vmul.f32 %v472, %v179
        %v476 = vadd.f32 %v225, %v474
        %v477 = vadd.f32 %v225, %v475
        %v478 = vmul.f32 %v471, %v184
        %v479 = vmul.f32 %v472, %v184
        %v480 = vmul.f32 %v473, %v184
        %v484 = vrot.slane %v478, 1
        %v485 = vrot.slane %v479, 1
        %v486 = vsel %vm240, %v484, %v485
        %v487 = vrot.slane %v480, 1
        %v488 = vsel %vm240, %v485, %v487
        %v491 = vadd.f32 %v476, %v486
        %v492 = vadd.f32 %v477, %v488
        %v493 = vmul.f32 %v471, %v189
        %v494 = vmul.f32 %v472, %v189
        %v495 = vmul.f32 %v473, %v189
        %v499 = vrot.slane %v493, 2
        %v500 = vrot.slane %v494, 2
        %v501 = vsel %vm256, %v499, %v500
        %v502 = vrot.slane %v495, 2
        %v503 = vsel %vm256, %v500, %v502
        %v506 = vadd.f32 %v491, %v501
        %v507 = vadd.f32 %v492, %v503
        %v508 = vld [vmem:[%s424] sm:$0xff]
        %v509 = vld [vmem:[%s424 + $0x8] sm:$0xff]
        %v510 = vld [vmem:[%s424 + $0x10] sm:$0x3]
        %v511 = vmul.f32 %v508, %v194
        %v512 = vmul.f32 %v509, %v194
        %v513 = vadd.f32 %v506, %v511
        %v514 = vadd.f32 %v507, %v512
        %v515 = vmul.f32 %v508, %v199
        %v516 = vmul.f32 %v509, %v199
        %v517 = vmul.f32 %v510, %v199
        %v521 = vrot.slane %v515, 1
        %v522 = vrot.slane %v516, 1
        %v523 = vsel %vm240, %v521, %v522
        %v524 = vrot.slane %v517, 1
        %v525 = vsel %vm240, %v522, %v524
        %v528 = vadd.f32 %v513, %v523
        %v529 = vadd.f32 %v514, %v525
        %v530 = vmul.f32 %v508, %v204
        %v531 = vmul.f32 %v509, %v204
        %v532 = vmul.f32 %v510, %v204
        %v536 = vrot.slane %v530, 2
        %v537 = vrot.slane %v531, 2
        %v538 = vsel %vm256, %v536, %v537
        %v539 = vrot.slane %v532, 2
        %v540 = vsel %vm256, %v537, %v539
        %v543 = vadd.f32 %v528, %v538
        %v544 = vadd.f32 %v529, %v540
        %s545 = scalar_lea.vmem %s172, 96
        %v546 = vld [vmem:[%s545] sm:$0xff]
        %v547 = vld [vmem:[%s545 + $0x8] sm:$0xff]
        %v548 = vld [vmem:[%s545 + $0x10] sm:$0x3]
        %v549 = vmul.f32 %v546, %v209
        %v550 = vmul.f32 %v547, %v209
        %v551 = vadd.f32 %v543, %v549
        %v552 = vadd.f32 %v544, %v550
        %v553 = vmul.f32 %v546, %v214
        %v554 = vmul.f32 %v547, %v214
        %v555 = vmul.f32 %v548, %v214
        %v559 = vrot.slane %v553, 1
        %v560 = vrot.slane %v554, 1
        %v561 = vsel %vm240, %v559, %v560
        %v562 = vrot.slane %v555, 1
        %v563 = vsel %vm240, %v560, %v562
        %v566 = vadd.f32 %v551, %v561
        %v567 = vadd.f32 %v552, %v563
        %v568 = vmul.f32 %v546, %v219
        %v569 = vmul.f32 %v547, %v219
        %v570 = vmul.f32 %v548, %v219
        %v574 = vrot.slane %v568, 2
        %v575 = vrot.slane %v569, 2
        %v576 = vsel %vm256, %v574, %v575
        %v577 = vrot.slane %v570, 2
        %v578 = vsel %vm256, %v575, %v577
        %v581 = vadd.f32 %v566, %v576
        %v582 = vadd.f32 %v567, %v578
        %vm583 = vcmp.ge.f32.partialorder %v581, 0.0
        %vm584 = vcmp.ge.f32.partialorder %v582, 0.0
        %v585 = vmul.f32 %v581, 0.1
        %v586 = vmul.f32 %v582, 0.1
        %v587 = vsel %vm583, %v581, %v585
        %v588 = vsel %vm584, %v582, %v586
        %s589 = scalar_lea.vmem %s166, 32 [#allocation2]
        %590 = vst [vmem:[%s589] sm:$0xff] %v587
        %591 = vst [vmem:[%s589 + $0x8] sm:$0xff] %v588
        %v592 = vld [vmem:[%s424] sm:$0xff]
        %v593 = vld [vmem:[%s424 + $0x8] sm:$0xff]
        %v594 = vld [vmem:[%s424 + $0x10] sm:$0x3]
        %v595 = vmul.f32 %v592, %v179
        %v596 = vmul.f32 %v593, %v179
        %v597 = vadd.f32 %v225, %v595
        %v598 = vadd.f32 %v225, %v596
        %v599 = vmul.f32 %v592, %v184
        %v600 = vmul.f32 %v593, %v184
        %v601 = vmul.f32 %v594, %v184
        %v605 = vrot.slane %v599, 1
        %v606 = vrot.slane %v600, 1
        %v607 = vsel %vm240, %v605, %v606
        %v608 = vrot.slane %v601, 1
        %v609 = vsel %vm240, %v606, %v608
        %v612 = vadd.f32 %v597, %v607
        %v613 = vadd.f32 %v598, %v609
        %v614 = vmul.f32 %v592, %v189
        %v615 = vmul.f32 %v593, %v189
        %v616 = vmul.f32 %v594, %v189
        %v620 = vrot.slane %v614, 2
        %v621 = vrot.slane %v615, 2
        %v622 = vsel %vm256, %v620, %v621
        %v623 = vrot.slane %v616, 2
        %v624 = vsel %vm256, %v621, %v623
        %v627 = vadd.f32 %v612, %v622
        %v628 = vadd.f32 %v613, %v624
        %v629 = vld [vmem:[%s545] sm:$0xff]
        %v630 = vld [vmem:[%s545 + $0x8] sm:$0xff]
        %v631 = vld [vmem:[%s545 + $0x10] sm:$0x3]
        %v632 = vmul.f32 %v629, %v194
        %v633 = vmul.f32 %v630, %v194
        %v634 = vadd.f32 %v627, %v632
        %v635 = vadd.f32 %v628, %v633
        %v636 = vmul.f32 %v629, %v199
        %v637 = vmul.f32 %v630, %v199
        %v638 = vmul.f32 %v631, %v199
        %v642 = vrot.slane %v636, 1
        %v643 = vrot.slane %v637, 1
        %v644 = vsel %vm240, %v642, %v643
        %v645 = vrot.slane %v638, 1
        %v646 = vsel %vm240, %v643, %v645
        %v649 = vadd.f32 %v634, %v644
        %v650 = vadd.f32 %v635, %v646
        %v651 = vmul.f32 %v629, %v204
        %v652 = vmul.f32 %v630, %v204
        %v653 = vmul.f32 %v631, %v204
        %v657 = vrot.slane %v651, 2
        %v658 = vrot.slane %v652, 2
        %v659 = vsel %vm256, %v657, %v658
        %v660 = vrot.slane %v653, 2
        %v661 = vsel %vm256, %v658, %v660
        %v664 = vadd.f32 %v649, %v659
        %v665 = vadd.f32 %v650, %v661
        %s666 = scalar_lea.vmem %s172, 120
        %v667 = vld [vmem:[%s666] sm:$0xff]
        %v668 = vld [vmem:[%s666 + $0x8] sm:$0xff]
        %v669 = vld [vmem:[%s666 + $0x10] sm:$0x3]
        %v670 = vmul.f32 %v667, %v209
        %v671 = vmul.f32 %v668, %v209
        %v672 = vadd.f32 %v664, %v670
        %v673 = vadd.f32 %v665, %v671
        %v674 = vmul.f32 %v667, %v214
        %v675 = vmul.f32 %v668, %v214
        %v676 = vmul.f32 %v669, %v214
        %v680 = vrot.slane %v674, 1
        %v681 = vrot.slane %v675, 1
        %v682 = vsel %vm240, %v680, %v681
        %v683 = vrot.slane %v676, 1
        %v684 = vsel %vm240, %v681, %v683
        %v687 = vadd.f32 %v672, %v682
        %v688 = vadd.f32 %v673, %v684
        %v689 = vmul.f32 %v667, %v219
        %v690 = vmul.f32 %v668, %v219
        %v691 = vmul.f32 %v669, %v219
        %v695 = vrot.slane %v689, 2
        %v696 = vrot.slane %v690, 2
        %v697 = vsel %vm256, %v695, %v696
        %v698 = vrot.slane %v691, 2
        %v699 = vsel %vm256, %v696, %v698
        %v702 = vadd.f32 %v687, %v697
        %v703 = vadd.f32 %v688, %v699
        %vm704 = vcmp.ge.f32.partialorder %v702, 0.0
        %vm705 = vcmp.ge.f32.partialorder %v703, 0.0
        %v706 = vmul.f32 %v702, 0.1
        %v707 = vmul.f32 %v703, 0.1
        %v708 = vsel %vm704, %v702, %v706
        %v709 = vsel %vm705, %v703, %v707
        %s710 = scalar_lea.vmem %s166, 48 [#allocation2]
        %711 = vst [vmem:[%s710] sm:$0xff] %v708
        %712 = vst [vmem:[%s710 + $0x8] sm:$0xff] %v709
        %v713 = vld [vmem:[%s545] sm:$0xff]
        %v714 = vld [vmem:[%s545 + $0x8] sm:$0xff]
        %v715 = vld [vmem:[%s545 + $0x10] sm:$0x3]
        %v716 = vmul.f32 %v713, %v179
        %v717 = vmul.f32 %v714, %v179
        %v718 = vadd.f32 %v225, %v716
        %v719 = vadd.f32 %v225, %v717
        %v720 = vmul.f32 %v713, %v184
        %v721 = vmul.f32 %v714, %v184
        %v722 = vmul.f32 %v715, %v184
        %v726 = vrot.slane %v720, 1
        %v727 = vrot.slane %v721, 1
        %v728 = vsel %vm240, %v726, %v727
        %v729 = vrot.slane %v722, 1
        %v730 = vsel %vm240, %v727, %v729
        %v733 = vadd.f32 %v718, %v728
        %v734 = vadd.f32 %v719, %v730
        %v735 = vmul.f32 %v713, %v189
        %v736 = vmul.f32 %v714, %v189
        %v737 = vmul.f32 %v715, %v189
        %v741 = vrot.slane %v735, 2
        %v742 = vrot.slane %v736, 2
        %v743 = vsel %vm256, %v741, %v742
        %v744 = vrot.slane %v737, 2
        %v745 = vsel %vm256, %v742, %v744
        %v748 = vadd.f32 %v733, %v743
        %v749 = vadd.f32 %v734, %v745
        %v750 = vld [vmem:[%s666] sm:$0xff]
        %v751 = vld [vmem:[%s666 + $0x8] sm:$0xff]
        %v752 = vld [vmem:[%s666 + $0x10] sm:$0x3]
        %v753 = vmul.f32 %v750, %v194
        %v754 = vmul.f32 %v751, %v194
        %v755 = vadd.f32 %v748, %v753
        %v756 = vadd.f32 %v749, %v754
        %v757 = vmul.f32 %v750, %v199
        %v758 = vmul.f32 %v751, %v199
        %v759 = vmul.f32 %v752, %v199
        %v763 = vrot.slane %v757, 1
        %v764 = vrot.slane %v758, 1
        %v765 = vsel %vm240, %v763, %v764
        %v766 = vrot.slane %v759, 1
        %v767 = vsel %vm240, %v764, %v766
        %v770 = vadd.f32 %v755, %v765
        %v771 = vadd.f32 %v756, %v767
        %v772 = vmul.f32 %v750, %v204
        %v773 = vmul.f32 %v751, %v204
        %v774 = vmul.f32 %v752, %v204
        %v778 = vrot.slane %v772, 2
        %v779 = vrot.slane %v773, 2
        %v780 = vsel %vm256, %v778, %v779
        %v781 = vrot.slane %v774, 2
        %v782 = vsel %vm256, %v779, %v781
        %v785 = vadd.f32 %v770, %v780
        %v786 = vadd.f32 %v771, %v782
        %s787 = scalar_lea.vmem %s172, 144
        %v788 = vld [vmem:[%s787] sm:$0xff]
        %v789 = vld [vmem:[%s787 + $0x8] sm:$0xff]
        %v790 = vld [vmem:[%s787 + $0x10] sm:$0x3]
        %v791 = vmul.f32 %v788, %v209
        %v792 = vmul.f32 %v789, %v209
        %v793 = vadd.f32 %v785, %v791
        %v794 = vadd.f32 %v786, %v792
        %v795 = vmul.f32 %v788, %v214
        %v796 = vmul.f32 %v789, %v214
        %v797 = vmul.f32 %v790, %v214
        %v801 = vrot.slane %v795, 1
        %v802 = vrot.slane %v796, 1
        %v803 = vsel %vm240, %v801, %v802
        %v804 = vrot.slane %v797, 1
        %v805 = vsel %vm240, %v802, %v804
        %v808 = vadd.f32 %v793, %v803
        %v809 = vadd.f32 %v794, %v805
        %v810 = vmul.f32 %v788, %v219
        %v811 = vmul.f32 %v789, %v219
        %v812 = vmul.f32 %v790, %v219
        %v816 = vrot.slane %v810, 2
        %v817 = vrot.slane %v811, 2
        %v818 = vsel %vm256, %v816, %v817
        %v819 = vrot.slane %v812, 2
        %v820 = vsel %vm256, %v817, %v819
        %v823 = vadd.f32 %v808, %v818
        %v824 = vadd.f32 %v809, %v820
        %vm825 = vcmp.ge.f32.partialorder %v823, 0.0
        %vm826 = vcmp.ge.f32.partialorder %v824, 0.0
        %v827 = vmul.f32 %v823, 0.1
        %v828 = vmul.f32 %v824, 0.1
        %v829 = vsel %vm825, %v823, %v827
        %v830 = vsel %vm826, %v824, %v828
        %s831 = scalar_lea.vmem %s166, 64 [#allocation2]
        %832 = vst [vmem:[%s831] sm:$0xff] %v829
        %833 = vst [vmem:[%s831 + $0x8] sm:$0xff] %v830
        %v834 = vld [vmem:[%s666] sm:$0xff]
        %v835 = vld [vmem:[%s666 + $0x8] sm:$0xff]
        %v836 = vld [vmem:[%s666 + $0x10] sm:$0x3]
        %v837 = vmul.f32 %v834, %v179
        %v838 = vmul.f32 %v835, %v179
        %v839 = vadd.f32 %v225, %v837
        %v840 = vadd.f32 %v225, %v838
        %v841 = vmul.f32 %v834, %v184
        %v842 = vmul.f32 %v835, %v184
        %v843 = vmul.f32 %v836, %v184
        %v847 = vrot.slane %v841, 1
        %v848 = vrot.slane %v842, 1
        %v849 = vsel %vm240, %v847, %v848
        %v850 = vrot.slane %v843, 1
        %v851 = vsel %vm240, %v848, %v850
        %v854 = vadd.f32 %v839, %v849
        %v855 = vadd.f32 %v840, %v851
        %v856 = vmul.f32 %v834, %v189
        %v857 = vmul.f32 %v835, %v189
        %v858 = vmul.f32 %v836, %v189
        %v862 = vrot.slane %v856, 2
        %v863 = vrot.slane %v857, 2
        %v864 = vsel %vm256, %v862, %v863
        %v865 = vrot.slane %v858, 2
        %v866 = vsel %vm256, %v863, %v865
        %v869 = vadd.f32 %v854, %v864
        %v870 = vadd.f32 %v855, %v866
        %v871 = vld [vmem:[%s787] sm:$0xff]
        %v872 = vld [vmem:[%s787 + $0x8] sm:$0xff]
        %v873 = vld [vmem:[%s787 + $0x10] sm:$0x3]
        %v874 = vmul.f32 %v871, %v194
        %v875 = vmul.f32 %v872, %v194
        %v876 = vadd.f32 %v869, %v874
        %v877 = vadd.f32 %v870, %v875
        %v878 = vmul.f32 %v871, %v199
        %v879 = vmul.f32 %v872, %v199
        %v880 = vmul.f32 %v873, %v199
        %v884 = vrot.slane %v878, 1
        %v885 = vrot.slane %v879, 1
        %v886 = vsel %vm240, %v884, %v885
        %v887 = vrot.slane %v880, 1
        %v888 = vsel %vm240, %v885, %v887
        %v891 = vadd.f32 %v876, %v886
        %v892 = vadd.f32 %v877, %v888
        %v893 = vmul.f32 %v871, %v204
        %v894 = vmul.f32 %v872, %v204
        %v895 = vmul.f32 %v873, %v204
        %v899 = vrot.slane %v893, 2
        %v900 = vrot.slane %v894, 2
        %v901 = vsel %vm256, %v899, %v900
        %v902 = vrot.slane %v895, 2
        %v903 = vsel %vm256, %v900, %v902
        %v906 = vadd.f32 %v891, %v901
        %v907 = vadd.f32 %v892, %v903
        %s908 = scalar_lea.vmem %s172, 168
        %v909 = vld [vmem:[%s908] sm:$0xff]
        %v910 = vld [vmem:[%s908 + $0x8] sm:$0xff]
        %v911 = vld [vmem:[%s908 + $0x10] sm:$0x3]
        %v912 = vmul.f32 %v909, %v209
        %v913 = vmul.f32 %v910, %v209
        %v914 = vadd.f32 %v906, %v912
        %v915 = vadd.f32 %v907, %v913
        %v916 = vmul.f32 %v909, %v214
        %v917 = vmul.f32 %v910, %v214
        %v918 = vmul.f32 %v911, %v214
        %v922 = vrot.slane %v916, 1
        %v923 = vrot.slane %v917, 1
        %v924 = vsel %vm240, %v922, %v923
        %v925 = vrot.slane %v918, 1
        %v926 = vsel %vm240, %v923, %v925
        %v929 = vadd.f32 %v914, %v924
        %v930 = vadd.f32 %v915, %v926
        %v931 = vmul.f32 %v909, %v219
        %v932 = vmul.f32 %v910, %v219
        %v933 = vmul.f32 %v911, %v219
        %v937 = vrot.slane %v931, 2
        %v938 = vrot.slane %v932, 2
        %v939 = vsel %vm256, %v937, %v938
        %v940 = vrot.slane %v933, 2
        %v941 = vsel %vm256, %v938, %v940
        %v944 = vadd.f32 %v929, %v939
        %v945 = vadd.f32 %v930, %v941
        %vm946 = vcmp.ge.f32.partialorder %v944, 0.0
        %vm947 = vcmp.ge.f32.partialorder %v945, 0.0
        %v948 = vmul.f32 %v944, 0.1
        %v949 = vmul.f32 %v945, 0.1
        %v950 = vsel %vm946, %v944, %v948
        %v951 = vsel %vm947, %v945, %v949
        %s952 = scalar_lea.vmem %s166, 80 [#allocation2]
        %953 = vst [vmem:[%s952] sm:$0xff] %v950
        %954 = vst [vmem:[%s952 + $0x8] sm:$0xff] %v951
        %v955 = vld [vmem:[%s787] sm:$0xff]
        %v956 = vld [vmem:[%s787 + $0x8] sm:$0xff]
        %v957 = vld [vmem:[%s787 + $0x10] sm:$0x3]
        %v958 = vmul.f32 %v955, %v179
        %v959 = vmul.f32 %v956, %v179
        %v960 = vadd.f32 %v225, %v958
        %v961 = vadd.f32 %v225, %v959
        %v962 = vmul.f32 %v955, %v184
        %v963 = vmul.f32 %v956, %v184
        %v964 = vmul.f32 %v957, %v184
        %v968 = vrot.slane %v962, 1
        %v969 = vrot.slane %v963, 1
        %v970 = vsel %vm240, %v968, %v969
        %v971 = vrot.slane %v964, 1
        %v972 = vsel %vm240, %v969, %v971
        %v975 = vadd.f32 %v960, %v970
        %v976 = vadd.f32 %v961, %v972
        %v977 = vmul.f32 %v955, %v189
        %v978 = vmul.f32 %v956, %v189
        %v979 = vmul.f32 %v957, %v189
        %v983 = vrot.slane %v977, 2
        %v984 = vrot.slane %v978, 2
        %v985 = vsel %vm256, %v983, %v984
        %v986 = vrot.slane %v979, 2
        %v987 = vsel %vm256, %v984, %v986
        %v990 = vadd.f32 %v975, %v985
        %v991 = vadd.f32 %v976, %v987
        %v992 = vld [vmem:[%s908] sm:$0xff]
        %v993 = vld [vmem:[%s908 + $0x8] sm:$0xff]
        %v994 = vld [vmem:[%s908 + $0x10] sm:$0x3]
        %v995 = vmul.f32 %v992, %v194
        %v996 = vmul.f32 %v993, %v194
        %v997 = vadd.f32 %v990, %v995
        %v998 = vadd.f32 %v991, %v996
        %v999 = vmul.f32 %v992, %v199
        %v1000 = vmul.f32 %v993, %v199
        %v1001 = vmul.f32 %v994, %v199
        %v1005 = vrot.slane %v999, 1
        %v1006 = vrot.slane %v1000, 1
        %v1007 = vsel %vm240, %v1005, %v1006
        %v1008 = vrot.slane %v1001, 1
        %v1009 = vsel %vm240, %v1006, %v1008
        %v1012 = vadd.f32 %v997, %v1007
        %v1013 = vadd.f32 %v998, %v1009
        %v1014 = vmul.f32 %v992, %v204
        %v1015 = vmul.f32 %v993, %v204
        %v1016 = vmul.f32 %v994, %v204
        %v1020 = vrot.slane %v1014, 2
        %v1021 = vrot.slane %v1015, 2
        %v1022 = vsel %vm256, %v1020, %v1021
        %v1023 = vrot.slane %v1016, 2
        %v1024 = vsel %vm256, %v1021, %v1023
        %v1027 = vadd.f32 %v1012, %v1022
        %v1028 = vadd.f32 %v1013, %v1024
        %s1029 = scalar_lea.vmem %s172, 192
        %v1030 = vld [vmem:[%s1029] sm:$0xff]
        %v1031 = vld [vmem:[%s1029 + $0x8] sm:$0xff]
        %v1032 = vld [vmem:[%s1029 + $0x10] sm:$0x3]
        %v1033 = vmul.f32 %v1030, %v209
        %v1034 = vmul.f32 %v1031, %v209
        %v1035 = vadd.f32 %v1027, %v1033
        %v1036 = vadd.f32 %v1028, %v1034
        %v1037 = vmul.f32 %v1030, %v214
        %v1038 = vmul.f32 %v1031, %v214
        %v1039 = vmul.f32 %v1032, %v214
        %v1043 = vrot.slane %v1037, 1
        %v1044 = vrot.slane %v1038, 1
        %v1045 = vsel %vm240, %v1043, %v1044
        %v1046 = vrot.slane %v1039, 1
        %v1047 = vsel %vm240, %v1044, %v1046
        %v1050 = vadd.f32 %v1035, %v1045
        %v1051 = vadd.f32 %v1036, %v1047
        %v1052 = vmul.f32 %v1030, %v219
        %v1053 = vmul.f32 %v1031, %v219
        %v1054 = vmul.f32 %v1032, %v219
        %v1058 = vrot.slane %v1052, 2
        %v1059 = vrot.slane %v1053, 2
        %v1060 = vsel %vm256, %v1058, %v1059
        %v1061 = vrot.slane %v1054, 2
        %v1062 = vsel %vm256, %v1059, %v1061
        %v1065 = vadd.f32 %v1050, %v1060
        %v1066 = vadd.f32 %v1051, %v1062
        %vm1067 = vcmp.ge.f32.partialorder %v1065, 0.0
        %vm1068 = vcmp.ge.f32.partialorder %v1066, 0.0
        %v1069 = vmul.f32 %v1065, 0.1
        %v1070 = vmul.f32 %v1066, 0.1
        %v1071 = vsel %vm1067, %v1065, %v1069
        %v1072 = vsel %vm1068, %v1066, %v1070
        %s1073 = scalar_lea.vmem %s166, 96 [#allocation2]
        %1074 = vst [vmem:[%s1073] sm:$0xff] %v1071
        %1075 = vst [vmem:[%s1073 + $0x8] sm:$0xff] %v1072
        %v1076 = vld [vmem:[%s908] sm:$0xff]
        %v1077 = vld [vmem:[%s908 + $0x8] sm:$0xff]
        %v1078 = vld [vmem:[%s908 + $0x10] sm:$0x3]
        %v1079 = vmul.f32 %v1076, %v179
        %v1080 = vmul.f32 %v1077, %v179
        %v1081 = vadd.f32 %v225, %v1079
        %v1082 = vadd.f32 %v225, %v1080
        %v1083 = vmul.f32 %v1076, %v184
        %v1084 = vmul.f32 %v1077, %v184
        %v1085 = vmul.f32 %v1078, %v184
        %v1089 = vrot.slane %v1083, 1
        %v1090 = vrot.slane %v1084, 1
        %v1091 = vsel %vm240, %v1089, %v1090
        %v1092 = vrot.slane %v1085, 1
        %v1093 = vsel %vm240, %v1090, %v1092
        %v1096 = vadd.f32 %v1081, %v1091
        %v1097 = vadd.f32 %v1082, %v1093
        %v1098 = vmul.f32 %v1076, %v189
        %v1099 = vmul.f32 %v1077, %v189
        %v1100 = vmul.f32 %v1078, %v189
        %v1104 = vrot.slane %v1098, 2
        %v1105 = vrot.slane %v1099, 2
        %v1106 = vsel %vm256, %v1104, %v1105
        %v1107 = vrot.slane %v1100, 2
        %v1108 = vsel %vm256, %v1105, %v1107
        %v1111 = vadd.f32 %v1096, %v1106
        %v1112 = vadd.f32 %v1097, %v1108
        %v1113 = vld [vmem:[%s1029] sm:$0xff]
        %v1114 = vld [vmem:[%s1029 + $0x8] sm:$0xff]
        %v1115 = vld [vmem:[%s1029 + $0x10] sm:$0x3]
        %v1116 = vmul.f32 %v1113, %v194
        %v1117 = vmul.f32 %v1114, %v194
        %v1118 = vadd.f32 %v1111, %v1116
        %v1119 = vadd.f32 %v1112, %v1117
        %v1120 = vmul.f32 %v1113, %v199
        %v1121 = vmul.f32 %v1114, %v199
        %v1122 = vmul.f32 %v1115, %v199
        %v1126 = vrot.slane %v1120, 1
        %v1127 = vrot.slane %v1121, 1
        %v1128 = vsel %vm240, %v1126, %v1127
        %v1129 = vrot.slane %v1122, 1
        %v1130 = vsel %vm240, %v1127, %v1129
        %v1133 = vadd.f32 %v1118, %v1128
        %v1134 = vadd.f32 %v1119, %v1130
        %v1135 = vmul.f32 %v1113, %v204
        %v1136 = vmul.f32 %v1114, %v204
        %v1137 = vmul.f32 %v1115, %v204
        %v1141 = vrot.slane %v1135, 2
        %v1142 = vrot.slane %v1136, 2
        %v1143 = vsel %vm256, %v1141, %v1142
        %v1144 = vrot.slane %v1137, 2
        %v1145 = vsel %vm256, %v1142, %v1144
        %v1148 = vadd.f32 %v1133, %v1143
        %v1149 = vadd.f32 %v1134, %v1145
        %s1150 = scalar_lea.vmem %s172, 216
        %v1151 = vld [vmem:[%s1150] sm:$0xff]
        %v1152 = vld [vmem:[%s1150 + $0x8] sm:$0xff]
        %v1153 = vld [vmem:[%s1150 + $0x10] sm:$0x3]
        %v1154 = vmul.f32 %v1151, %v209
        %v1155 = vmul.f32 %v1152, %v209
        %v1156 = vadd.f32 %v1148, %v1154
        %v1157 = vadd.f32 %v1149, %v1155
        %v1158 = vmul.f32 %v1151, %v214
        %v1159 = vmul.f32 %v1152, %v214
        %v1160 = vmul.f32 %v1153, %v214
        %v1164 = vrot.slane %v1158, 1
        %v1165 = vrot.slane %v1159, 1
        %v1166 = vsel %vm240, %v1164, %v1165
        %v1167 = vrot.slane %v1160, 1
        %v1168 = vsel %vm240, %v1165, %v1167
        %v1171 = vadd.f32 %v1156, %v1166
        %v1172 = vadd.f32 %v1157, %v1168
        %v1173 = vmul.f32 %v1151, %v219
        %v1174 = vmul.f32 %v1152, %v219
        %v1175 = vmul.f32 %v1153, %v219
        %v1179 = vrot.slane %v1173, 2
        %v1180 = vrot.slane %v1174, 2
        %v1181 = vsel %vm256, %v1179, %v1180
        %v1182 = vrot.slane %v1175, 2
        %v1183 = vsel %vm256, %v1180, %v1182
        %v1186 = vadd.f32 %v1171, %v1181
        %v1187 = vadd.f32 %v1172, %v1183
        %vm1188 = vcmp.ge.f32.partialorder %v1186, 0.0
        %vm1189 = vcmp.ge.f32.partialorder %v1187, 0.0
        %v1190 = vmul.f32 %v1186, 0.1
        %v1191 = vmul.f32 %v1187, 0.1
        %v1192 = vsel %vm1188, %v1186, %v1190
        %v1193 = vsel %vm1189, %v1187, %v1191
        %s1194 = scalar_lea.vmem %s166, 112 [#allocation2]
        %1195 = vst [vmem:[%s1194] sm:$0xff] %v1192
        %1196 = vst [vmem:[%s1194 + $0x8] sm:$0xff] %v1193
        %v1197 = vld [vmem:[%s1029] sm:$0xff]
        %v1198 = vld [vmem:[%s1029 + $0x8] sm:$0xff]
        %v1199 = vld [vmem:[%s1029 + $0x10] sm:$0x3]
        %v1200 = vmul.f32 %v1197, %v179
        %v1201 = vmul.f32 %v1198, %v179
        %v1202 = vadd.f32 %v225, %v1200
        %v1203 = vadd.f32 %v225, %v1201
        %v1204 = vmul.f32 %v1197, %v184
        %v1205 = vmul.f32 %v1198, %v184
        %v1206 = vmul.f32 %v1199, %v184
        %v1210 = vrot.slane %v1204, 1
        %v1211 = vrot.slane %v1205, 1
        %v1212 = vsel %vm240, %v1210, %v1211
        %v1213 = vrot.slane %v1206, 1
        %v1214 = vsel %vm240, %v1211, %v1213
        %v1217 = vadd.f32 %v1202, %v1212
        %v1218 = vadd.f32 %v1203, %v1214
        %v1219 = vmul.f32 %v1197, %v189
        %v1220 = vmul.f32 %v1198, %v189
        %v1221 = vmul.f32 %v1199, %v189
        %v1225 = vrot.slane %v1219, 2
        %v1226 = vrot.slane %v1220, 2
        %v1227 = vsel %vm256, %v1225, %v1226
        %v1228 = vrot.slane %v1221, 2
        %v1229 = vsel %vm256, %v1226, %v1228
        %v1232 = vadd.f32 %v1217, %v1227
        %v1233 = vadd.f32 %v1218, %v1229
        %v1234 = vld [vmem:[%s1150] sm:$0xff]
        %v1235 = vld [vmem:[%s1150 + $0x8] sm:$0xff]
        %v1236 = vld [vmem:[%s1150 + $0x10] sm:$0x3]
        %v1237 = vmul.f32 %v1234, %v194
        %v1238 = vmul.f32 %v1235, %v194
        %v1239 = vadd.f32 %v1232, %v1237
        %v1240 = vadd.f32 %v1233, %v1238
        %v1241 = vmul.f32 %v1234, %v199
        %v1242 = vmul.f32 %v1235, %v199
        %v1243 = vmul.f32 %v1236, %v199
        %v1247 = vrot.slane %v1241, 1
        %v1248 = vrot.slane %v1242, 1
        %v1249 = vsel %vm240, %v1247, %v1248
        %v1250 = vrot.slane %v1243, 1
        %v1251 = vsel %vm240, %v1248, %v1250
        %v1254 = vadd.f32 %v1239, %v1249
        %v1255 = vadd.f32 %v1240, %v1251
        %v1256 = vmul.f32 %v1234, %v204
        %v1257 = vmul.f32 %v1235, %v204
        %v1258 = vmul.f32 %v1236, %v204
        %v1262 = vrot.slane %v1256, 2
        %v1263 = vrot.slane %v1257, 2
        %v1264 = vsel %vm256, %v1262, %v1263
        %v1265 = vrot.slane %v1258, 2
        %v1266 = vsel %vm256, %v1263, %v1265
        %v1269 = vadd.f32 %v1254, %v1264
        %v1270 = vadd.f32 %v1255, %v1266
        %s1271 = scalar_lea.vmem %s172, 240
        %v1272 = vld [vmem:[%s1271] sm:$0xff]
        %v1273 = vld [vmem:[%s1271 + $0x8] sm:$0xff]
        %v1274 = vld [vmem:[%s1271 + $0x10] sm:$0x3]
        %v1275 = vmul.f32 %v1272, %v209
        %v1276 = vmul.f32 %v1273, %v209
        %v1277 = vadd.f32 %v1269, %v1275
        %v1278 = vadd.f32 %v1270, %v1276
        %v1279 = vmul.f32 %v1272, %v214
        %v1280 = vmul.f32 %v1273, %v214
        %v1281 = vmul.f32 %v1274, %v214
        %v1285 = vrot.slane %v1279, 1
        %v1286 = vrot.slane %v1280, 1
        %v1287 = vsel %vm240, %v1285, %v1286
        %v1288 = vrot.slane %v1281, 1
        %v1289 = vsel %vm240, %v1286, %v1288
        %v1292 = vadd.f32 %v1277, %v1287
        %v1293 = vadd.f32 %v1278, %v1289
        %v1294 = vmul.f32 %v1272, %v219
        %v1295 = vmul.f32 %v1273, %v219
        %v1296 = vmul.f32 %v1274, %v219
        %v1300 = vrot.slane %v1294, 2
        %v1301 = vrot.slane %v1295, 2
        %v1302 = vsel %vm256, %v1300, %v1301
        %v1303 = vrot.slane %v1296, 2
        %v1304 = vsel %vm256, %v1301, %v1303
        %v1307 = vadd.f32 %v1292, %v1302
        %v1308 = vadd.f32 %v1293, %v1304
        %vm1309 = vcmp.ge.f32.partialorder %v1307, 0.0
        %vm1310 = vcmp.ge.f32.partialorder %v1308, 0.0
        %v1311 = vmul.f32 %v1307, 0.1
        %v1312 = vmul.f32 %v1308, 0.1
        %v1313 = vsel %vm1309, %v1307, %v1311
        %v1314 = vsel %vm1310, %v1308, %v1312
        %s1315 = scalar_lea.vmem %s166, 128 [#allocation2]
        %1316 = vst [vmem:[%s1315] sm:$0xff] %v1313
        %1317 = vst [vmem:[%s1315 + $0x8] sm:$0xff] %v1314
        %v1318 = vld [vmem:[%s1150] sm:$0xff]
        %v1319 = vld [vmem:[%s1150 + $0x8] sm:$0xff]
        %v1320 = vld [vmem:[%s1150 + $0x10] sm:$0x3]
        %v1321 = vmul.f32 %v1318, %v179
        %v1322 = vmul.f32 %v1319, %v179
        %v1323 = vadd.f32 %v225, %v1321
        %v1324 = vadd.f32 %v225, %v1322
        %v1325 = vmul.f32 %v1318, %v184
        %v1326 = vmul.f32 %v1319, %v184
        %v1327 = vmul.f32 %v1320, %v184
        %v1331 = vrot.slane %v1325, 1
        %v1332 = vrot.slane %v1326, 1
        %v1333 = vsel %vm240, %v1331, %v1332
        %v1334 = vrot.slane %v1327, 1
        %v1335 = vsel %vm240, %v1332, %v1334
        %v1338 = vadd.f32 %v1323, %v1333
        %v1339 = vadd.f32 %v1324, %v1335
        %v1340 = vmul.f32 %v1318, %v189
        %v1341 = vmul.f32 %v1319, %v189
        %v1342 = vmul.f32 %v1320, %v189
        %v1346 = vrot.slane %v1340, 2
        %v1347 = vrot.slane %v1341, 2
        %v1348 = vsel %vm256, %v1346, %v1347
        %v1349 = vrot.slane %v1342, 2
        %v1350 = vsel %vm256, %v1347, %v1349
        %v1353 = vadd.f32 %v1338, %v1348
        %v1354 = vadd.f32 %v1339, %v1350
        %v1355 = vld [vmem:[%s1271] sm:$0xff]
        %v1356 = vld [vmem:[%s1271 + $0x8] sm:$0xff]
        %v1357 = vld [vmem:[%s1271 + $0x10] sm:$0x3]
        %v1358 = vmul.f32 %v1355, %v194
        %v1359 = vmul.f32 %v1356, %v194
        %v1360 = vadd.f32 %v1353, %v1358
        %v1361 = vadd.f32 %v1354, %v1359
        %v1362 = vmul.f32 %v1355, %v199
        %v1363 = vmul.f32 %v1356, %v199
        %v1364 = vmul.f32 %v1357, %v199
        %v1368 = vrot.slane %v1362, 1
        %v1369 = vrot.slane %v1363, 1
        %v1370 = vsel %vm240, %v1368, %v1369
        %v1371 = vrot.slane %v1364, 1
        %v1372 = vsel %vm240, %v1369, %v1371
        %v1375 = vadd.f32 %v1360, %v1370
        %v1376 = vadd.f32 %v1361, %v1372
        %v1377 = vmul.f32 %v1355, %v204
        %v1378 = vmul.f32 %v1356, %v204
        %v1379 = vmul.f32 %v1357, %v204
        %v1383 = vrot.slane %v1377, 2
        %v1384 = vrot.slane %v1378, 2
        %v1385 = vsel %vm256, %v1383, %v1384
        %v1386 = vrot.slane %v1379, 2
        %v1387 = vsel %vm256, %v1384, %v1386
        %v1390 = vadd.f32 %v1375, %v1385
        %v1391 = vadd.f32 %v1376, %v1387
        %s1392 = scalar_lea.vmem %s172, 264
        %v1393 = vld [vmem:[%s1392] sm:$0xff]
        %v1394 = vld [vmem:[%s1392 + $0x8] sm:$0xff]
        %v1395 = vld [vmem:[%s1392 + $0x10] sm:$0x3]
        %v1396 = vmul.f32 %v1393, %v209
        %v1397 = vmul.f32 %v1394, %v209
        %v1398 = vadd.f32 %v1390, %v1396
        %v1399 = vadd.f32 %v1391, %v1397
        %v1400 = vmul.f32 %v1393, %v214
        %v1401 = vmul.f32 %v1394, %v214
        %v1402 = vmul.f32 %v1395, %v214
        %v1406 = vrot.slane %v1400, 1
        %v1407 = vrot.slane %v1401, 1
        %v1408 = vsel %vm240, %v1406, %v1407
        %v1409 = vrot.slane %v1402, 1
        %v1410 = vsel %vm240, %v1407, %v1409
        %v1413 = vadd.f32 %v1398, %v1408
        %v1414 = vadd.f32 %v1399, %v1410
        %v1415 = vmul.f32 %v1393, %v219
        %v1416 = vmul.f32 %v1394, %v219
        %v1417 = vmul.f32 %v1395, %v219
        %v1421 = vrot.slane %v1415, 2
        %v1422 = vrot.slane %v1416, 2
        %v1423 = vsel %vm256, %v1421, %v1422
        %v1424 = vrot.slane %v1417, 2
        %v1425 = vsel %vm256, %v1422, %v1424
        %v1428 = vadd.f32 %v1413, %v1423
        %v1429 = vadd.f32 %v1414, %v1425
        %vm1430 = vcmp.ge.f32.partialorder %v1428, 0.0
        %vm1431 = vcmp.ge.f32.partialorder %v1429, 0.0
        %v1432 = vmul.f32 %v1428, 0.1
        %v1433 = vmul.f32 %v1429, 0.1
        %v1434 = vsel %vm1430, %v1428, %v1432
        %v1435 = vsel %vm1431, %v1429, %v1433
        %s1436 = scalar_lea.vmem %s166, 144 [#allocation2]
        %1437 = vst [vmem:[%s1436] sm:$0xff] %v1434
        %1438 = vst [vmem:[%s1436 + $0x8] sm:$0xff] %v1435
        %v1439 = vld [vmem:[%s1271] sm:$0xff]
        %v1440 = vld [vmem:[%s1271 + $0x8] sm:$0xff]
        %v1441 = vld [vmem:[%s1271 + $0x10] sm:$0x3]
        %v1442 = vmul.f32 %v1439, %v179
        %v1443 = vmul.f32 %v1440, %v179
        %v1444 = vadd.f32 %v225, %v1442
        %v1445 = vadd.f32 %v225, %v1443
        %v1446 = vmul.f32 %v1439, %v184
        %v1447 = vmul.f32 %v1440, %v184
        %v1448 = vmul.f32 %v1441, %v184
        %v1452 = vrot.slane %v1446, 1
        %v1453 = vrot.slane %v1447, 1
        %v1454 = vsel %vm240, %v1452, %v1453
        %v1455 = vrot.slane %v1448, 1
        %v1456 = vsel %vm240, %v1453, %v1455
        %v1459 = vadd.f32 %v1444, %v1454
        %v1460 = vadd.f32 %v1445, %v1456
        %v1461 = vmul.f32 %v1439, %v189
        %v1462 = vmul.f32 %v1440, %v189
        %v1463 = vmul.f32 %v1441, %v189
        %v1467 = vrot.slane %v1461, 2
        %v1468 = vrot.slane %v1462, 2
        %v1469 = vsel %vm256, %v1467, %v1468
        %v1470 = vrot.slane %v1463, 2
        %v1471 = vsel %vm256, %v1468, %v1470
        %v1474 = vadd.f32 %v1459, %v1469
        %v1475 = vadd.f32 %v1460, %v1471
        %v1476 = vld [vmem:[%s1392] sm:$0xff]
        %v1477 = vld [vmem:[%s1392 + $0x8] sm:$0xff]
        %v1478 = vld [vmem:[%s1392 + $0x10] sm:$0x3]
        %v1479 = vmul.f32 %v1476, %v194
        %v1480 = vmul.f32 %v1477, %v194
        %v1481 = vadd.f32 %v1474, %v1479
        %v1482 = vadd.f32 %v1475, %v1480
        %v1483 = vmul.f32 %v1476, %v199
        %v1484 = vmul.f32 %v1477, %v199
        %v1485 = vmul.f32 %v1478, %v199
        %v1489 = vrot.slane %v1483, 1
        %v1490 = vrot.slane %v1484, 1
        %v1491 = vsel %vm240, %v1489, %v1490
        %v1492 = vrot.slane %v1485, 1
        %v1493 = vsel %vm240, %v1490, %v1492
        %v1496 = vadd.f32 %v1481, %v1491
        %v1497 = vadd.f32 %v1482, %v1493
        %v1498 = vmul.f32 %v1476, %v204
        %v1499 = vmul.f32 %v1477, %v204
        %v1500 = vmul.f32 %v1478, %v204
        %v1504 = vrot.slane %v1498, 2
        %v1505 = vrot.slane %v1499, 2
        %v1506 = vsel %vm256, %v1504, %v1505
        %v1507 = vrot.slane %v1500, 2
        %v1508 = vsel %vm256, %v1505, %v1507
        %v1511 = vadd.f32 %v1496, %v1506
        %v1512 = vadd.f32 %v1497, %v1508
        %s1513 = scalar_lea.vmem %s172, 288
        %v1514 = vld [vmem:[%s1513] sm:$0xff]
        %v1515 = vld [vmem:[%s1513 + $0x8] sm:$0xff]
        %v1516 = vld [vmem:[%s1513 + $0x10] sm:$0x3]
        %v1517 = vmul.f32 %v1514, %v209
        %v1518 = vmul.f32 %v1515, %v209
        %v1519 = vadd.f32 %v1511, %v1517
        %v1520 = vadd.f32 %v1512, %v1518
        %v1521 = vmul.f32 %v1514, %v214
        %v1522 = vmul.f32 %v1515, %v214
        %v1523 = vmul.f32 %v1516, %v214
        %v1527 = vrot.slane %v1521, 1
        %v1528 = vrot.slane %v1522, 1
        %v1529 = vsel %vm240, %v1527, %v1528
        %v1530 = vrot.slane %v1523, 1
        %v1531 = vsel %vm240, %v1528, %v1530
        %v1534 = vadd.f32 %v1519, %v1529
        %v1535 = vadd.f32 %v1520, %v1531
        %v1536 = vmul.f32 %v1514, %v219
        %v1537 = vmul.f32 %v1515, %v219
        %v1538 = vmul.f32 %v1516, %v219
        %v1542 = vrot.slane %v1536, 2
        %v1543 = vrot.slane %v1537, 2
        %v1544 = vsel %vm256, %v1542, %v1543
        %v1545 = vrot.slane %v1538, 2
        %v1546 = vsel %vm256, %v1543, %v1545
        %v1549 = vadd.f32 %v1534, %v1544
        %v1550 = vadd.f32 %v1535, %v1546
        %vm1551 = vcmp.ge.f32.partialorder %v1549, 0.0
        %vm1552 = vcmp.ge.f32.partialorder %v1550, 0.0
        %v1553 = vmul.f32 %v1549, 0.1
        %v1554 = vmul.f32 %v1550, 0.1
        %v1555 = vsel %vm1551, %v1549, %v1553
        %v1556 = vsel %vm1552, %v1550, %v1554
        %s1557 = scalar_lea.vmem %s166, 160 [#allocation2]
        %1558 = vst [vmem:[%s1557] sm:$0xff] %v1555
        %1559 = vst [vmem:[%s1557 + $0x8] sm:$0xff] %v1556
        %v1560 = vld [vmem:[%s1392] sm:$0xff]
        %v1561 = vld [vmem:[%s1392 + $0x8] sm:$0xff]
        %v1562 = vld [vmem:[%s1392 + $0x10] sm:$0x3]
        %v1563 = vmul.f32 %v1560, %v179
        %v1564 = vmul.f32 %v1561, %v179
        %v1565 = vadd.f32 %v225, %v1563
        %v1566 = vadd.f32 %v225, %v1564
        %v1567 = vmul.f32 %v1560, %v184
        %v1568 = vmul.f32 %v1561, %v184
        %v1569 = vmul.f32 %v1562, %v184
        %v1573 = vrot.slane %v1567, 1
        %v1574 = vrot.slane %v1568, 1
        %v1575 = vsel %vm240, %v1573, %v1574
        %v1576 = vrot.slane %v1569, 1
        %v1577 = vsel %vm240, %v1574, %v1576
        %v1580 = vadd.f32 %v1565, %v1575
        %v1581 = vadd.f32 %v1566, %v1577
        %v1582 = vmul.f32 %v1560, %v189
        %v1583 = vmul.f32 %v1561, %v189
        %v1584 = vmul.f32 %v1562, %v189
        %v1588 = vrot.slane %v1582, 2
        %v1589 = vrot.slane %v1583, 2
        %v1590 = vsel %vm256, %v1588, %v1589
        %v1591 = vrot.slane %v1584, 2
        %v1592 = vsel %vm256, %v1589, %v1591
        %v1595 = vadd.f32 %v1580, %v1590
        %v1596 = vadd.f32 %v1581, %v1592
        %v1597 = vld [vmem:[%s1513] sm:$0xff]
        %v1598 = vld [vmem:[%s1513 + $0x8] sm:$0xff]
        %v1599 = vld [vmem:[%s1513 + $0x10] sm:$0x3]
        %v1600 = vmul.f32 %v1597, %v194
        %v1601 = vmul.f32 %v1598, %v194
        %v1602 = vadd.f32 %v1595, %v1600
        %v1603 = vadd.f32 %v1596, %v1601
        %v1604 = vmul.f32 %v1597, %v199
        %v1605 = vmul.f32 %v1598, %v199
        %v1606 = vmul.f32 %v1599, %v199
        %v1610 = vrot.slane %v1604, 1
        %v1611 = vrot.slane %v1605, 1
        %v1612 = vsel %vm240, %v1610, %v1611
        %v1613 = vrot.slane %v1606, 1
        %v1614 = vsel %vm240, %v1611, %v1613
        %v1617 = vadd.f32 %v1602, %v1612
        %v1618 = vadd.f32 %v1603, %v1614
        %v1619 = vmul.f32 %v1597, %v204
        %v1620 = vmul.f32 %v1598, %v204
        %v1621 = vmul.f32 %v1599, %v204
        %v1625 = vrot.slane %v1619, 2
        %v1626 = vrot.slane %v1620, 2
        %v1627 = vsel %vm256, %v1625, %v1626
        %v1628 = vrot.slane %v1621, 2
        %v1629 = vsel %vm256, %v1626, %v1628
        %v1632 = vadd.f32 %v1617, %v1627
        %v1633 = vadd.f32 %v1618, %v1629
        %s1634 = scalar_lea.vmem %s172, 312
        %v1635 = vld [vmem:[%s1634] sm:$0xff]
        %v1636 = vld [vmem:[%s1634 + $0x8] sm:$0xff]
        %v1637 = vld [vmem:[%s1634 + $0x10] sm:$0x3]
        %v1638 = vmul.f32 %v1635, %v209
        %v1639 = vmul.f32 %v1636, %v209
        %v1640 = vadd.f32 %v1632, %v1638
        %v1641 = vadd.f32 %v1633, %v1639
        %v1642 = vmul.f32 %v1635, %v214
        %v1643 = vmul.f32 %v1636, %v214
        %v1644 = vmul.f32 %v1637, %v214
        %v1648 = vrot.slane %v1642, 1
        %v1649 = vrot.slane %v1643, 1
        %v1650 = vsel %vm240, %v1648, %v1649
        %v1651 = vrot.slane %v1644, 1
        %v1652 = vsel %vm240, %v1649, %v1651
        %v1655 = vadd.f32 %v1640, %v1650
        %v1656 = vadd.f32 %v1641, %v1652
        %v1657 = vmul.f32 %v1635, %v219
        %v1658 = vmul.f32 %v1636, %v219
        %v1659 = vmul.f32 %v1637, %v219
        %v1663 = vrot.slane %v1657, 2
        %v1664 = vrot.slane %v1658, 2
        %v1665 = vsel %vm256, %v1663, %v1664
        %v1666 = vrot.slane %v1659, 2
        %v1667 = vsel %vm256, %v1664, %v1666
        %v1670 = vadd.f32 %v1655, %v1665
        %v1671 = vadd.f32 %v1656, %v1667
        %vm1672 = vcmp.ge.f32.partialorder %v1670, 0.0
        %vm1673 = vcmp.ge.f32.partialorder %v1671, 0.0
        %v1674 = vmul.f32 %v1670, 0.1
        %v1675 = vmul.f32 %v1671, 0.1
        %v1676 = vsel %vm1672, %v1670, %v1674
        %v1677 = vsel %vm1673, %v1671, %v1675
        %s1678 = scalar_lea.vmem %s166, 176 [#allocation2]
        %1679 = vst [vmem:[%s1678] sm:$0xff] %v1676
        %1680 = vst [vmem:[%s1678 + $0x8] sm:$0xff] %v1677
        %v1681 = vld [vmem:[%s1513] sm:$0xff]
        %v1682 = vld [vmem:[%s1513 + $0x8] sm:$0xff]
        %v1683 = vld [vmem:[%s1513 + $0x10] sm:$0x3]
        %v1684 = vmul.f32 %v1681, %v179
        %v1685 = vmul.f32 %v1682, %v179
        %v1686 = vadd.f32 %v225, %v1684
        %v1687 = vadd.f32 %v225, %v1685
        %v1688 = vmul.f32 %v1681, %v184
        %v1689 = vmul.f32 %v1682, %v184
        %v1690 = vmul.f32 %v1683, %v184
        %v1694 = vrot.slane %v1688, 1
        %v1695 = vrot.slane %v1689, 1
        %v1696 = vsel %vm240, %v1694, %v1695
        %v1697 = vrot.slane %v1690, 1
        %v1698 = vsel %vm240, %v1695, %v1697
        %v1701 = vadd.f32 %v1686, %v1696
        %v1702 = vadd.f32 %v1687, %v1698
        %v1703 = vmul.f32 %v1681, %v189
        %v1704 = vmul.f32 %v1682, %v189
        %v1705 = vmul.f32 %v1683, %v189
        %v1709 = vrot.slane %v1703, 2
        %v1710 = vrot.slane %v1704, 2
        %v1711 = vsel %vm256, %v1709, %v1710
        %v1712 = vrot.slane %v1705, 2
        %v1713 = vsel %vm256, %v1710, %v1712
        %v1716 = vadd.f32 %v1701, %v1711
        %v1717 = vadd.f32 %v1702, %v1713
        %v1718 = vld [vmem:[%s1634] sm:$0xff]
        %v1719 = vld [vmem:[%s1634 + $0x8] sm:$0xff]
        %v1720 = vld [vmem:[%s1634 + $0x10] sm:$0x3]
        %v1721 = vmul.f32 %v1718, %v194
        %v1722 = vmul.f32 %v1719, %v194
        %v1723 = vadd.f32 %v1716, %v1721
        %v1724 = vadd.f32 %v1717, %v1722
        %v1725 = vmul.f32 %v1718, %v199
        %v1726 = vmul.f32 %v1719, %v199
        %v1727 = vmul.f32 %v1720, %v199
        %v1731 = vrot.slane %v1725, 1
        %v1732 = vrot.slane %v1726, 1
        %v1733 = vsel %vm240, %v1731, %v1732
        %v1734 = vrot.slane %v1727, 1
        %v1735 = vsel %vm240, %v1732, %v1734
        %v1738 = vadd.f32 %v1723, %v1733
        %v1739 = vadd.f32 %v1724, %v1735
        %v1740 = vmul.f32 %v1718, %v204
        %v1741 = vmul.f32 %v1719, %v204
        %v1742 = vmul.f32 %v1720, %v204
        %v1746 = vrot.slane %v1740, 2
        %v1747 = vrot.slane %v1741, 2
        %v1748 = vsel %vm256, %v1746, %v1747
        %v1749 = vrot.slane %v1742, 2
        %v1750 = vsel %vm256, %v1747, %v1749
        %v1753 = vadd.f32 %v1738, %v1748
        %v1754 = vadd.f32 %v1739, %v1750
        %s1755 = scalar_lea.vmem %s172, 336
        %v1756 = vld [vmem:[%s1755] sm:$0xff]
        %v1757 = vld [vmem:[%s1755 + $0x8] sm:$0xff]
        %v1758 = vld [vmem:[%s1755 + $0x10] sm:$0x3]
        %v1759 = vmul.f32 %v1756, %v209
        %v1760 = vmul.f32 %v1757, %v209
        %v1761 = vadd.f32 %v1753, %v1759
        %v1762 = vadd.f32 %v1754, %v1760
        %v1763 = vmul.f32 %v1756, %v214
        %v1764 = vmul.f32 %v1757, %v214
        %v1765 = vmul.f32 %v1758, %v214
        %v1769 = vrot.slane %v1763, 1
        %v1770 = vrot.slane %v1764, 1
        %v1771 = vsel %vm240, %v1769, %v1770
        %v1772 = vrot.slane %v1765, 1
        %v1773 = vsel %vm240, %v1770, %v1772
        %v1776 = vadd.f32 %v1761, %v1771
        %v1777 = vadd.f32 %v1762, %v1773
        %v1778 = vmul.f32 %v1756, %v219
        %v1779 = vmul.f32 %v1757, %v219
        %v1780 = vmul.f32 %v1758, %v219
        %v1784 = vrot.slane %v1778, 2
        %v1785 = vrot.slane %v1779, 2
        %v1786 = vsel %vm256, %v1784, %v1785
        %v1787 = vrot.slane %v1780, 2
        %v1788 = vsel %vm256, %v1785, %v1787
        %v1791 = vadd.f32 %v1776, %v1786
        %v1792 = vadd.f32 %v1777, %v1788
        %vm1793 = vcmp.ge.f32.partialorder %v1791, 0.0
        %vm1794 = vcmp.ge.f32.partialorder %v1792, 0.0
        %v1795 = vmul.f32 %v1791, 0.1
        %v1796 = vmul.f32 %v1792, 0.1
        %v1797 = vsel %vm1793, %v1791, %v1795
        %v1798 = vsel %vm1794, %v1792, %v1796
        %s1799 = scalar_lea.vmem %s166, 192 [#allocation2]
        %1800 = vst [vmem:[%s1799] sm:$0xff] %v1797
        %1801 = vst [vmem:[%s1799 + $0x8] sm:$0xff] %v1798
        %v1802 = vld [vmem:[%s1634] sm:$0xff]
        %v1803 = vld [vmem:[%s1634 + $0x8] sm:$0xff]
        %v1804 = vld [vmem:[%s1634 + $0x10] sm:$0x3]
        %v1805 = vmul.f32 %v1802, %v179
        %v1806 = vmul.f32 %v1803, %v179
        %v1807 = vadd.f32 %v225, %v1805
        %v1808 = vadd.f32 %v225, %v1806
        %v1809 = vmul.f32 %v1802, %v184
        %v1810 = vmul.f32 %v1803, %v184
        %v1811 = vmul.f32 %v1804, %v184
        %v1815 = vrot.slane %v1809, 1
        %v1816 = vrot.slane %v1810, 1
        %v1817 = vsel %vm240, %v1815, %v1816
        %v1818 = vrot.slane %v1811, 1
        %v1819 = vsel %vm240, %v1816, %v1818
        %v1822 = vadd.f32 %v1807, %v1817
        %v1823 = vadd.f32 %v1808, %v1819
        %v1824 = vmul.f32 %v1802, %v189
        %v1825 = vmul.f32 %v1803, %v189
        %v1826 = vmul.f32 %v1804, %v189
        %v1830 = vrot.slane %v1824, 2
        %v1831 = vrot.slane %v1825, 2
        %v1832 = vsel %vm256, %v1830, %v1831
        %v1833 = vrot.slane %v1826, 2
        %v1834 = vsel %vm256, %v1831, %v1833
        %v1837 = vadd.f32 %v1822, %v1832
        %v1838 = vadd.f32 %v1823, %v1834
        %v1839 = vld [vmem:[%s1755] sm:$0xff]
        %v1840 = vld [vmem:[%s1755 + $0x8] sm:$0xff]
        %v1841 = vld [vmem:[%s1755 + $0x10] sm:$0x3]
        %v1842 = vmul.f32 %v1839, %v194
        %v1843 = vmul.f32 %v1840, %v194
        %v1844 = vadd.f32 %v1837, %v1842
        %v1845 = vadd.f32 %v1838, %v1843
        %v1846 = vmul.f32 %v1839, %v199
        %v1847 = vmul.f32 %v1840, %v199
        %v1848 = vmul.f32 %v1841, %v199
        %v1852 = vrot.slane %v1846, 1
        %v1853 = vrot.slane %v1847, 1
        %v1854 = vsel %vm240, %v1852, %v1853
        %v1855 = vrot.slane %v1848, 1
        %v1856 = vsel %vm240, %v1853, %v1855
        %v1859 = vadd.f32 %v1844, %v1854
        %v1860 = vadd.f32 %v1845, %v1856
        %v1861 = vmul.f32 %v1839, %v204
        %v1862 = vmul.f32 %v1840, %v204
        %v1863 = vmul.f32 %v1841, %v204
        %v1867 = vrot.slane %v1861, 2
        %v1868 = vrot.slane %v1862, 2
        %v1869 = vsel %vm256, %v1867, %v1868
        %v1870 = vrot.slane %v1863, 2
        %v1871 = vsel %vm256, %v1868, %v1870
        %v1874 = vadd.f32 %v1859, %v1869
        %v1875 = vadd.f32 %v1860, %v1871
        %s1876 = scalar_lea.vmem %s172, 360
        %v1877 = vld [vmem:[%s1876] sm:$0xff]
        %v1878 = vld [vmem:[%s1876 + $0x8] sm:$0xff]
        %v1879 = vld [vmem:[%s1876 + $0x10] sm:$0x3]
        %v1880 = vmul.f32 %v1877, %v209
        %v1881 = vmul.f32 %v1878, %v209
        %v1882 = vadd.f32 %v1874, %v1880
        %v1883 = vadd.f32 %v1875, %v1881
        %v1884 = vmul.f32 %v1877, %v214
        %v1885 = vmul.f32 %v1878, %v214
        %v1886 = vmul.f32 %v1879, %v214
        %v1890 = vrot.slane %v1884, 1
        %v1891 = vrot.slane %v1885, 1
        %v1892 = vsel %vm240, %v1890, %v1891
        %v1893 = vrot.slane %v1886, 1
        %v1894 = vsel %vm240, %v1891, %v1893
        %v1897 = vadd.f32 %v1882, %v1892
        %v1898 = vadd.f32 %v1883, %v1894
        %v1899 = vmul.f32 %v1877, %v219
        %v1900 = vmul.f32 %v1878, %v219
        %v1901 = vmul.f32 %v1879, %v219
        %v1905 = vrot.slane %v1899, 2
        %v1906 = vrot.slane %v1900, 2
        %v1907 = vsel %vm256, %v1905, %v1906
        %v1908 = vrot.slane %v1901, 2
        %v1909 = vsel %vm256, %v1906, %v1908
        %v1912 = vadd.f32 %v1897, %v1907
        %v1913 = vadd.f32 %v1898, %v1909
        %vm1914 = vcmp.ge.f32.partialorder %v1912, 0.0
        %vm1915 = vcmp.ge.f32.partialorder %v1913, 0.0
        %v1916 = vmul.f32 %v1912, 0.1
        %v1917 = vmul.f32 %v1913, 0.1
        %v1918 = vsel %vm1914, %v1912, %v1916
        %v1919 = vsel %vm1915, %v1913, %v1917
        %s1920 = scalar_lea.vmem %s166, 208 [#allocation2]
        %1921 = vst [vmem:[%s1920] sm:$0xff] %v1918
        %1922 = vst [vmem:[%s1920 + $0x8] sm:$0xff] %v1919
        %v1923 = vld [vmem:[%s1755] sm:$0xff]
        %v1924 = vld [vmem:[%s1755 + $0x8] sm:$0xff]
        %v1925 = vld [vmem:[%s1755 + $0x10] sm:$0x3]
        %v1926 = vmul.f32 %v1923, %v179
        %v1927 = vmul.f32 %v1924, %v179
        %v1928 = vadd.f32 %v225, %v1926
        %v1929 = vadd.f32 %v225, %v1927
        %v1930 = vmul.f32 %v1923, %v184
        %v1931 = vmul.f32 %v1924, %v184
        %v1932 = vmul.f32 %v1925, %v184
        %v1936 = vrot.slane %v1930, 1
        %v1937 = vrot.slane %v1931, 1
        %v1938 = vsel %vm240, %v1936, %v1937
        %v1939 = vrot.slane %v1932, 1
        %v1940 = vsel %vm240, %v1937, %v1939
        %v1943 = vadd.f32 %v1928, %v1938
        %v1944 = vadd.f32 %v1929, %v1940
        %v1945 = vmul.f32 %v1923, %v189
        %v1946 = vmul.f32 %v1924, %v189
        %v1947 = vmul.f32 %v1925, %v189
        %v1951 = vrot.slane %v1945, 2
        %v1952 = vrot.slane %v1946, 2
        %v1953 = vsel %vm256, %v1951, %v1952
        %v1954 = vrot.slane %v1947, 2
        %v1955 = vsel %vm256, %v1952, %v1954
        %v1958 = vadd.f32 %v1943, %v1953
        %v1959 = vadd.f32 %v1944, %v1955
        %v1960 = vld [vmem:[%s1876] sm:$0xff]
        %v1961 = vld [vmem:[%s1876 + $0x8] sm:$0xff]
        %v1962 = vld [vmem:[%s1876 + $0x10] sm:$0x3]
        %v1963 = vmul.f32 %v1960, %v194
        %v1964 = vmul.f32 %v1961, %v194
        %v1965 = vadd.f32 %v1958, %v1963
        %v1966 = vadd.f32 %v1959, %v1964
        %v1967 = vmul.f32 %v1960, %v199
        %v1968 = vmul.f32 %v1961, %v199
        %v1969 = vmul.f32 %v1962, %v199
        %v1973 = vrot.slane %v1967, 1
        %v1974 = vrot.slane %v1968, 1
        %v1975 = vsel %vm240, %v1973, %v1974
        %v1976 = vrot.slane %v1969, 1
        %v1977 = vsel %vm240, %v1974, %v1976
        %v1980 = vadd.f32 %v1965, %v1975
        %v1981 = vadd.f32 %v1966, %v1977
        %v1982 = vmul.f32 %v1960, %v204
        %v1983 = vmul.f32 %v1961, %v204
        %v1984 = vmul.f32 %v1962, %v204
        %v1988 = vrot.slane %v1982, 2
        %v1989 = vrot.slane %v1983, 2
        %v1990 = vsel %vm256, %v1988, %v1989
        %v1991 = vrot.slane %v1984, 2
        %v1992 = vsel %vm256, %v1989, %v1991
        %v1995 = vadd.f32 %v1980, %v1990
        %v1996 = vadd.f32 %v1981, %v1992
        %s1997 = scalar_lea.vmem %s172, 384
        %v1998 = vld [vmem:[%s1997] sm:$0xff]
        %v1999 = vld [vmem:[%s1997 + $0x8] sm:$0xff]
        %v2000 = vld [vmem:[%s1997 + $0x10] sm:$0x3]
        %v2001 = vmul.f32 %v1998, %v209
        %v2002 = vmul.f32 %v1999, %v209
        %v2003 = vadd.f32 %v1995, %v2001
        %v2004 = vadd.f32 %v1996, %v2002
        %v2005 = vmul.f32 %v1998, %v214
        %v2006 = vmul.f32 %v1999, %v214
        %v2007 = vmul.f32 %v2000, %v214
        %v2011 = vrot.slane %v2005, 1
        %v2012 = vrot.slane %v2006, 1
        %v2013 = vsel %vm240, %v2011, %v2012
        %v2014 = vrot.slane %v2007, 1
        %v2015 = vsel %vm240, %v2012, %v2014
        %v2018 = vadd.f32 %v2003, %v2013
        %v2019 = vadd.f32 %v2004, %v2015
        %v2020 = vmul.f32 %v1998, %v219
        %v2021 = vmul.f32 %v1999, %v219
        %v2022 = vmul.f32 %v2000, %v219
        %v2026 = vrot.slane %v2020, 2
        %v2027 = vrot.slane %v2021, 2
        %v2028 = vsel %vm256, %v2026, %v2027
        %v2029 = vrot.slane %v2022, 2
        %v2030 = vsel %vm256, %v2027, %v2029
        %v2033 = vadd.f32 %v2018, %v2028
        %v2034 = vadd.f32 %v2019, %v2030
        %vm2035 = vcmp.ge.f32.partialorder %v2033, 0.0
        %vm2036 = vcmp.ge.f32.partialorder %v2034, 0.0
        %v2037 = vmul.f32 %v2033, 0.1
        %v2038 = vmul.f32 %v2034, 0.1
        %v2039 = vsel %vm2035, %v2033, %v2037
        %v2040 = vsel %vm2036, %v2034, %v2038
        %s2041 = scalar_lea.vmem %s166, 224 [#allocation2]
        %2042 = vst [vmem:[%s2041] sm:$0xff] %v2039
        %2043 = vst [vmem:[%s2041 + $0x8] sm:$0xff] %v2040
        %v2044 = vld [vmem:[%s1876] sm:$0xff]
        %v2045 = vld [vmem:[%s1876 + $0x8] sm:$0xff]
        %v2046 = vld [vmem:[%s1876 + $0x10] sm:$0x3]
        %v2047 = vmul.f32 %v2044, %v179
        %v2048 = vmul.f32 %v2045, %v179
        %v2049 = vadd.f32 %v225, %v2047
        %v2050 = vadd.f32 %v225, %v2048
        %v2051 = vmul.f32 %v2044, %v184
        %v2052 = vmul.f32 %v2045, %v184
        %v2053 = vmul.f32 %v2046, %v184
        %v2057 = vrot.slane %v2051, 1
        %v2058 = vrot.slane %v2052, 1
        %v2059 = vsel %vm240, %v2057, %v2058
        %v2060 = vrot.slane %v2053, 1
        %v2061 = vsel %vm240, %v2058, %v2060
        %v2064 = vadd.f32 %v2049, %v2059
        %v2065 = vadd.f32 %v2050, %v2061
        %v2066 = vmul.f32 %v2044, %v189
        %v2067 = vmul.f32 %v2045, %v189
        %v2068 = vmul.f32 %v2046, %v189
        %v2072 = vrot.slane %v2066, 2
        %v2073 = vrot.slane %v2067, 2
        %v2074 = vsel %vm256, %v2072, %v2073
        %v2075 = vrot.slane %v2068, 2
        %v2076 = vsel %vm256, %v2073, %v2075
        %v2079 = vadd.f32 %v2064, %v2074
        %v2080 = vadd.f32 %v2065, %v2076
        %v2081 = vld [vmem:[%s1997] sm:$0xff]
        %v2082 = vld [vmem:[%s1997 + $0x8] sm:$0xff]
        %v2083 = vld [vmem:[%s1997 + $0x10] sm:$0x3]
        %v2084 = vmul.f32 %v2081, %v194
        %v2085 = vmul.f32 %v2082, %v194
        %v2086 = vadd.f32 %v2079, %v2084
        %v2087 = vadd.f32 %v2080, %v2085
        %v2088 = vmul.f32 %v2081, %v199
        %v2089 = vmul.f32 %v2082, %v199
        %v2090 = vmul.f32 %v2083, %v199
        %v2094 = vrot.slane %v2088, 1
        %v2095 = vrot.slane %v2089, 1
        %v2096 = vsel %vm240, %v2094, %v2095
        %v2097 = vrot.slane %v2090, 1
        %v2098 = vsel %vm240, %v2095, %v2097
        %v2101 = vadd.f32 %v2086, %v2096
        %v2102 = vadd.f32 %v2087, %v2098
        %v2103 = vmul.f32 %v2081, %v204
        %v2104 = vmul.f32 %v2082, %v204
        %v2105 = vmul.f32 %v2083, %v204
        %v2109 = vrot.slane %v2103, 2
        %v2110 = vrot.slane %v2104, 2
        %v2111 = vsel %vm256, %v2109, %v2110
        %v2112 = vrot.slane %v2105, 2
        %v2113 = vsel %vm256, %v2110, %v2112
        %v2116 = vadd.f32 %v2101, %v2111
        %v2117 = vadd.f32 %v2102, %v2113
        %s2118 = scalar_lea.vmem %s172, 408
        %v2119 = vld [vmem:[%s2118] sm:$0xff]
        %v2120 = vld [vmem:[%s2118 + $0x8] sm:$0xff]
        %v2121 = vld [vmem:[%s2118 + $0x10] sm:$0x3]
        %v2122 = vmul.f32 %v2119, %v209
        %v2123 = vmul.f32 %v2120, %v209
        %v2124 = vadd.f32 %v2116, %v2122
        %v2125 = vadd.f32 %v2117, %v2123
        %v2126 = vmul.f32 %v2119, %v214
        %v2127 = vmul.f32 %v2120, %v214
        %v2128 = vmul.f32 %v2121, %v214
        %v2132 = vrot.slane %v2126, 1
        %v2133 = vrot.slane %v2127, 1
        %v2134 = vsel %vm240, %v2132, %v2133
        %v2135 = vrot.slane %v2128, 1
        %v2136 = vsel %vm240, %v2133, %v2135
        %v2139 = vadd.f32 %v2124, %v2134
        %v2140 = vadd.f32 %v2125, %v2136
        %v2141 = vmul.f32 %v2119, %v219
        %v2142 = vmul.f32 %v2120, %v219
        %v2143 = vmul.f32 %v2121, %v219
        %v2147 = vrot.slane %v2141, 2
        %v2148 = vrot.slane %v2142, 2
        %v2149 = vsel %vm256, %v2147, %v2148
        %v2150 = vrot.slane %v2143, 2
        %v2151 = vsel %vm256, %v2148, %v2150
        %v2154 = vadd.f32 %v2139, %v2149
        %v2155 = vadd.f32 %v2140, %v2151
        %vm2156 = vcmp.ge.f32.partialorder %v2154, 0.0
        %vm2157 = vcmp.ge.f32.partialorder %v2155, 0.0
        %v2158 = vmul.f32 %v2154, 0.1
        %v2159 = vmul.f32 %v2155, 0.1
        %v2160 = vsel %vm2156, %v2154, %v2158
        %v2161 = vsel %vm2157, %v2155, %v2159
        %s2162 = scalar_lea.vmem %s166, 240 [#allocation2]
        %2163 = vst [vmem:[%s2162] sm:$0xff] %v2160
        %2164 = vst [vmem:[%s2162 + $0x8] sm:$0xff] %v2161
        %s2165 = sand.u32 %s93, 1
        %s2166 = scalar_lea.sflag [#allocation3], %s2165
        %s2167 = sand.u32 %s93, 1
        %s2168 = smul.addr %s2167, 256
        %s2169 = scalar_lea.vmem [#allocation2], %s2168
        // Predicated region
        $region33: #{tpu_custom_call.1} parent=31 // pred_check
          %p2170 = pneg %p103
        $region34: #{tpu_custom_call.1} parent=31 // pred_check_branch
          %2172 = sbr.rel (%p2170) target = $region36
        $region35: #{tpu_custom_call.1} parent=31 // pred_region
          %s2173 = smul.u32 16, %s17
          %s2175 = ssub.s32 4096, 4096
          %2176 = vsyncadd %s2166, %s2175
          %s2177 = smul.addr %s2173, 2
          %s2178 = smul.addr %s2177, 128
          %s2179 = scalar_lea.hbm %s3, %s2178
          %s2180 = sshll.u32 %s2169, 4
          %s2181 = int_to_ptr.vmem [resolvable:$true] %s2180
          %2186 = dma.vmem_to_hbm [thread:$0]  %s2181, 4096, %s2179, %s2166, 128, 128, 8
        $region36: #{tpu_custom_call.1} parent=31 // pred_fallthru
          _
      $region32: #{tpu_custom_call.1} parent=5 // pred_fallthru
        _
      %p2187 = scmp.le.s32.totalorder 2, %s12
      // Predicated region
      $region37: #{tpu_custom_call.1} parent=5 // pred_check
        %p2188 = pneg %p2187
      $region38: #{tpu_custom_call.1} parent=5 // pred_check_branch
        %2190 = sbr.rel (%p2188) target = $region40
      $region39: #{tpu_custom_call.1} parent=5 // pred_region
        %s2191 = ssub.s32 %s12, 2
        // Predicated region
        $region41: #{tpu_custom_call.1} parent=39 // pred_check
          %p2192 = pneg %p109
        $region42: #{tpu_custom_call.1} parent=39 // pred_check_branch
          %2194 = sbr.rel (%p2192) target = $region44
        $region43: #{tpu_custom_call.1} parent=39 // pred_region
          %s2195 = sand.u32 %s94, 1
          %s2196 = scalar_lea.sflag [#allocation3], %s2195
          %s2197 = sand.u32 %s94, 1
          %s2198 = smul.addr %s2197, 256
          %s2199 = scalar_lea.vmem [#allocation2], %s2198
          %2200 = dma.done %s2196, 4096
        $region44: #{tpu_custom_call.1} parent=39 // pred_fallthru
          _
      $region40: #{tpu_custom_call.1} parent=5 // pred_fallthru
        _
    $region6: #{tpu_custom_call.1} parent=1 // loop_footer
      %s16 = sadd.s32 1, %s12
    $region7: #{tpu_custom_call.1} parent=1 // loop_footer_branch
      %11 = sbr.rel target = $region3
    $region8: #{tpu_custom_call.1} parent=1 // loop_exit
      _
    %2201 = vsyncpa [#allocation3], 1
    %s2202 = scalar_lea.sflag [#allocation3], 1
    %2203 = vsyncpa %s2202, 1

</llo_original>
